<compile_context>
chip_gen: v6e
topology: v6e:2x2x1
jax: 0.10.0
libtpu: 0.0.40
codegen_flags: <defaults>
</compile_context>

<pallas_src>
import math
from functools import partial

import jax
import jax.numpy as jnp
from jax.experimental import pallas as pl
from jax.experimental.pallas import tpu as pltpu

LN_EPS = 1e-5


# ----------------------------- kernel helpers ------------------------------
def _layernorm(x, gamma, beta):
    mu = jnp.mean(x, axis=-1, keepdims=True)
    var = jnp.mean((x - mu) ** 2, axis=-1, keepdims=True)
    return (x - mu) * jax.lax.rsqrt(var + LN_EPS) * gamma + beta


def _gelu_new(x):
    # GPT-2 "gelu_new" (tanh approximation), matches HF activation.
    return 0.5 * x * (1.0 + jnp.tanh(
        jnp.sqrt(2.0 / jnp.pi) * (x + 0.044715 * x * x * x)))


# ----------------------- fused transformer layer stack ----------------------
def gpt2_stack_kernel(x_ref,
                      ln1_g, ln1_b, w_qkv, b_qkv, w_o, b_o,
                      ln2_g, ln2_b, w_fc, b_fc, w_fc2, b_fc2,
                      o_ref, *, n_head):
    l = pl.program_id(1)

    # Residual stream lives in the resident output block across the L axis.
    @pl.when(l == 0)
    def _():
        o_ref[0] = x_ref[0]

    x = o_ref[0]                                   # (S, D) f32 residual stream
    S, D = x.shape
    H = n_head
    E = D // H
    scale = 1.0 / math.sqrt(E)

    # --- attention sub-block ---
    h = _layernorm(x, ln1_g[0], ln1_b[0])                             # (S, D) f32
    # Fused full-width QKV projection (bf16 MXU inputs, f32 accumulation).
    qkv = jnp.dot(h.astype(jnp.bfloat16), w_qkv[0],
                  preferred_element_type=jnp.float32) + b_qkv[0]      # (S, 3D)

    q = (qkv[:, :D] * scale).reshape(S, H, E)       # fold 1/sqrt(Dh) into q once
    k = qkv[:, D:2 * D].reshape(S, H, E)
    v = qkv[:, 2 * D:].reshape(S, H, E)
    q = jnp.swapaxes(q, 0, 1).astype(jnp.bfloat16)                    # (H, S, E)
    k = jnp.swapaxes(k, 0, 1).astype(jnp.bfloat16)
    v = jnp.swapaxes(v, 0, 1).astype(jnp.bfloat16)

    s = jnp.einsum('hqe,hke->hqk', q, k,
                   preferred_element_type=jnp.float32)                # (H, S, S)
    # 2-D causal mask, broadcast over the head axis.
    row = jax.lax.broadcasted_iota(jnp.int32, (S, S), 0)
    col = jax.lax.broadcasted_iota(jnp.int32, (S, S), 1)
    s = jnp.where((col <= row)[None, :, :], s, -1e30)
    s = s - jnp.max(s, axis=-1, keepdims=True)
    p = jnp.exp(s)                                                    # f32 softmax
    p = p * pl.reciprocal(jnp.sum(p, axis=-1, keepdims=True), approx=True)

    ctx = jnp.einsum('hqk,hke->hqe', p.astype(jnp.bfloat16), v,
                     preferred_element_type=jnp.float32)              # (H, S, E)
    # Merge heads back to (S, D) and do one full-K output projection.
    ctx = jnp.swapaxes(ctx, 0, 1).reshape(S, D)
    attn = jnp.dot(ctx.astype(jnp.bfloat16), w_o[0],
                   preferred_element_type=jnp.float32) + b_o[0]       # (S, D)
    x = x + attn                                                      # f32 residual

    # --- MLP sub-block ---
    h2 = _layernorm(x, ln2_g[0], ln2_b[0])
    m = jnp.dot(h2.astype(jnp.bfloat16), w_fc[0],
                preferred_element_type=jnp.float32) + b_fc[0]         # (S, 4D)
    m = _gelu_new(m)                                                  # f32 gelu
    m = jnp.dot(m.astype(jnp.bfloat16), w_fc2[0],
                preferred_element_type=jnp.float32) + b_fc2[0]        # (S, D)

    o_ref[0] = x + m


def gpt2_layers(x, stacked, n_head):
    """Run all transformer blocks in one pallas_call with grid=(B, L)."""
    B, S, D = x.shape
    in_specs = [pl.BlockSpec((1, S, D), lambda b, l: (b, 0, 0))]
    for p in stacked:
        blk_shape = (1,) + p.shape[1:]
        in_specs.append(
            pl.BlockSpec(blk_shape,
                         lambda b, l, nd=p.ndim: (l,) + (0,) * (nd - 1)))
    L = stacked[0].shape[0]
    return pl.pallas_call(
        partial(gpt2_stack_kernel, n_head=n_head),
        out_shape=jax.ShapeDtypeStruct((B, S, D), jnp.float32),
        grid=(B, L),
        in_specs=in_specs,
        out_specs=pl.BlockSpec((1, S, D), lambda b, l: (b, 0, 0)),
        compiler_params=pltpu.CompilerParams(
            dimension_semantics=("parallel", "arbitrary"),
            vmem_limit_bytes=48 * 1024 * 1024),
    )(x, *stacked)


# ----------------------- fused pooled LayerNorm + score ---------------------
def pooled_head_kernel(x_ref, g_ref, b_ref, w_ref, o_ref):
    h = _layernorm(x_ref[...], g_ref[...], b_ref[...])
    o_ref[...] = jnp.dot(h, w_ref[...], preferred_element_type=jnp.float32)


def pooled_head(pooled, gamma, beta, w_score):
    B, D = pooled.shape
    C = w_score.shape[1]
    return pl.pallas_call(
        pooled_head_kernel,
        out_shape=jax.ShapeDtypeStruct((B, C), jnp.float32),
        grid=(1,),
        in_specs=[pl.BlockSpec((B, D), lambda i: (0, 0)),
                  pl.BlockSpec(gamma.shape, lambda i: (0, 0)),
                  pl.BlockSpec(beta.shape, lambda i: (0, 0)),
                  pl.BlockSpec((D, C), lambda i: (0, 0))],
        out_specs=pl.BlockSpec((B, C), lambda i: (0, 0)),
    )(pooled, gamma, beta, w_score)


# ------------------------------ params --------------------------------------
def init_params(key, *, vocab, n_pos, d, n_layer, n_head, n_labels):
    keys = jax.random.split(key, 4 + 6 * n_layer)
    ki = iter(keys)
    std = 0.02
    p = {
        "wte": jax.random.normal(next(ki), (vocab, d)) * std,
        "wpe": jax.random.normal(next(ki), (n_pos, d)) * std,
        "ln_f_g": jnp.ones((1, d)), "ln_f_b": jnp.zeros((1, d)),
        "w_score": jax.random.normal(next(ki), (d, n_labels)) * std,
        "blocks": [],
    }
    for _ in range(n_layer):
        blk = [
            jnp.ones((1, d)), jnp.zeros((1, d)),                                   # ln1
            jax.random.normal(next(ki), (d, 3 * d)) * std, jnp.zeros((1, 3 * d)),  # c_attn
            jax.random.normal(next(ki), (d, d)) * std, jnp.zeros((1, d)),          # c_proj
            jnp.ones((1, d)), jnp.zeros((1, d)),                                   # ln2
            jax.random.normal(next(ki), (d, 4 * d)) * std, jnp.zeros((1, 4 * d)),  # c_fc
            jax.random.normal(next(ki), (4 * d, d)) * std, jnp.zeros((1, d)),      # mlp c_proj
        ]
        p["blocks"].append([a.astype(jnp.float32) for a in blk])
    for k in ("wte", "wpe", "ln_f_g", "ln_f_b", "w_score"):
        p[k] = p[k].astype(jnp.float32)
    return p


def _stack_blocks(blocks):
    """Stack per-layer GPT-2 block params along a leading L axis.

    Matmul weights go to bf16 (f32 accumulation happens in-kernel); LayerNorm
    params and biases stay f32 and lane-dense (last dim = D / 3D / 4D).
    """
    def stack(i, bf16=False):
        s = jnp.stack([blk[i] for blk in blocks])
        return s.astype(jnp.bfloat16) if bf16 else s

    return [
        stack(0), stack(1),                  # ln1 gamma/beta          (L,1,D)
        stack(2, bf16=True), stack(3),       # c_attn W (L,D,3D), b (L,1,3D)
        stack(4, bf16=True), stack(5),       # c_proj W (L,D,D),  b (L,1,D)
        stack(6), stack(7),                  # ln2 gamma/beta          (L,1,D)
        stack(8, bf16=True), stack(9),       # c_fc   W (L,D,4D), b (L,1,4D)
        stack(10, bf16=True), stack(11),     # mlp c_proj W (L,4D,D), b (L,1,D)
    ]


# ------------------------------ full model ----------------------------------
@partial(jax.jit, static_argnames=("n_head", "pad_token_id"))
def my_gpt2_forward(params, input_ids, *, n_head, pad_token_id):
    B, S = input_ids.shape

    # TODO(synk): embedding gathers kept in plain JAX (no clean Pallas gather here).
    pos = jnp.arange(S)
    x = params["wte"][input_ids] + params["wpe"][pos][None, :, :]   # (B, S, D)
    x = x.astype(jnp.float32)

    # All transformer layers in one fused pallas_call (residual stays in VMEM).
    x = gpt2_layers(x, _stack_blocks(params["blocks"]), n_head)

    # HF GPT2ForSequenceClassification: hidden state of last non-pad token.
    # sequence_lengths = (argmax(input_ids == pad_id) - 1) % seq_len
    seq_len = (jnp.argmax((input_ids == pad_token_id).astype(jnp.int32),
                          axis=-1) - 1) % S
    pooled = x[jnp.arange(B), seq_len]                              # (B, D)

    # Final LayerNorm only on the pooled rows (row-wise LN => identical to
    # normalising all B*S rows and then gathering), fused with the score matmul.
    return pooled_head(pooled, params["ln_f_g"], params["ln_f_b"],
                       params["w_score"])                           # (B, n_labels)


# --------------------------------- main --------------------------------------
if __name__ == "__main__":
    # small, GPT-2-shaped config
    VOCAB, N_POS, D, N_LAYER, N_HEAD, N_LABELS = 128, 16, 32, 2, 4, 2
    B, S = 2, 8
    PAD_ID = 0

    key = jax.random.PRNGKey(0)
    kp, kx = jax.random.split(key)
    params = init_params(kp, vocab=VOCAB, n_pos=N_POS, d=D,
                         n_layer=N_LAYER, n_head=N_HEAD, n_labels=N_LABELS)

    input_ids = jax.random.randint(kx, (B, S), 1, VOCAB, dtype=jnp.int32)
    # pad the tail of the second sequence so the HF-style pooling path is exercised
    input_ids = input_ids.at[1, 5:].set(PAD_ID)

    logits = my_gpt2_forward(params, input_ids,
                             n_head=N_HEAD, pad_token_id=PAD_ID)
    jax.block_until_ready(logits)
    assert logits.shape == (B, N_LABELS) and logits.dtype == jnp.float32
    print("KERNEL_OK")
</pallas_src>

<mosaic_0001>
module attributes {stable_mosaic.version = 11 : i64} {
  func.func @pooled_head_kernel(%arg0: i32, %arg1: memref<2x32xf32, #tpu.memory_space<vmem>>, %arg2: memref<1x32xf32, #tpu.memory_space<vmem>>, %arg3: memref<1x32xf32, #tpu.memory_space<vmem>>, %arg4: memref<32x2xf32, #tpu.memory_space<vmem>>, %arg5: memref<2x2xf32, #tpu.memory_space<vmem>>) attributes {dimension_semantics = [#tpu.dimension_semantics<arbitrary>], iteration_bounds = array<i64: 1>, scalar_prefetch = 0 : i64, scratch_operands = 0 : i64, tpu.core_type = #tpu.core_type<tc>, window_params = [{pipeline_mode = #tpu.pipeline_mode<synchronous>, transform_indices = @transform_0, window_bounds = array<i64: 2, 32>}, {pipeline_mode = #tpu.pipeline_mode<synchronous>, transform_indices = @transform_1, window_bounds = array<i64: 1, 32>}, {pipeline_mode = #tpu.pipeline_mode<synchronous>, transform_indices = @transform_2, window_bounds = array<i64: 1, 32>}, {pipeline_mode = #tpu.pipeline_mode<synchronous>, transform_indices = @transform_3, window_bounds = array<i64: 32, 2>}, {pipeline_mode = #tpu.pipeline_mode<synchronous>, transform_indices = @transform_4, window_bounds = array<i64: 2, 2>}]} {
    %c0 = arith.constant 0 : index
    %c0_0 = arith.constant 0 : index
    %0 = vector.load %arg1[%c0, %c0_0] : memref<2x32xf32, #tpu.memory_space<vmem>>, vector<2x32xf32>
    %c0_1 = arith.constant 0 : index
    %c0_2 = arith.constant 0 : index
    %1 = vector.load %arg2[%c0_1, %c0_2] : memref<1x32xf32, #tpu.memory_space<vmem>>, vector<1x32xf32>
    %c0_3 = arith.constant 0 : index
    %c0_4 = arith.constant 0 : index
    %2 = vector.load %arg3[%c0_3, %c0_4] : memref<1x32xf32, #tpu.memory_space<vmem>>, vector<1x32xf32>
    %cst = arith.constant dense<0.000000e+00> : vector<2xf32>
    %3 = vector.multi_reduction <add>, %0, %cst [1] : vector<2x32xf32> to vector<2xf32>
    %4 = vector.shape_cast %3 : vector<2xf32> to vector<2x1xf32>
    %cst_5 = arith.constant 3.200000e+01 : f32
    %5 = vector.broadcast %cst_5 : f32 to vector<2x1xf32>
    %6 = arith.divf %4, %5 : vector<2x1xf32>
    %7 = vector.broadcast %6 : vector<2x1xf32> to vector<2x32xf32>
    %8 = arith.subf %0, %7 : vector<2x32xf32>
    %9 = arith.mulf %8, %8 : vector<2x32xf32>
    %cst_6 = arith.constant dense<0.000000e+00> : vector<2xf32>
    %10 = vector.multi_reduction <add>, %9, %cst_6 [1] : vector<2x32xf32> to vector<2xf32>
    %11 = vector.shape_cast %10 : vector<2xf32> to vector<2x1xf32>
    %cst_7 = arith.constant 3.200000e+01 : f32
    %12 = vector.broadcast %cst_7 : f32 to vector<2x1xf32>
    %13 = arith.divf %11, %12 : vector<2x1xf32>
    %14 = vector.broadcast %6 : vector<2x1xf32> to vector<2x32xf32>
    %15 = arith.subf %0, %14 : vector<2x32xf32>
    %cst_8 = arith.constant 9.99999974E-6 : f32
    %16 = vector.broadcast %cst_8 : f32 to vector<2x1xf32>
    %17 = arith.addf %13, %16 : vector<2x1xf32>
    %18 = math.rsqrt %17 : vector<2x1xf32>
    %19 = vector.broadcast %18 : vector<2x1xf32> to vector<2x32xf32>
    %20 = arith.mulf %15, %19 : vector<2x32xf32>
    %21 = vector.broadcast %1 : vector<1x32xf32> to vector<2x32xf32>
    %22 = arith.mulf %20, %21 : vector<2x32xf32>
    %23 = vector.broadcast %2 : vector<1x32xf32> to vector<2x32xf32>
    %24 = arith.addf %22, %23 : vector<2x32xf32>
    %c0_9 = arith.constant 0 : index
    %c0_10 = arith.constant 0 : index
    %25 = vector.load %arg4[%c0_9, %c0_10] : memref<32x2xf32, #tpu.memory_space<vmem>>, vector<32x2xf32>
    %cst_11 = arith.constant dense<0.000000e+00> : vector<2x2xf32>
    %26 = tpu.matmul %24, %25, %cst_11 {dimension_numbers = #tpu.dot_dimension_numbers<[1], [0], [0], [1], [0, 0, 1, 1], [], []>} : vector<2x32xf32>, vector<32x2xf32>, vector<2x2xf32> -> vector<2x2xf32>
    %c0_12 = arith.constant 0 : index
    %c0_13 = arith.constant 0 : index
    %27 = vector.load %arg5[%c0_12, %c0_13] : memref<2x2xf32, #tpu.memory_space<vmem>>, vector<2x2xf32>
    tpu.vector_store %arg5[%c0_12, %c0_13], %26 {strides = array<i32>} : memref<2x2xf32, #tpu.memory_space<vmem>>, vector<2x2xf32>,
    return
  }
  func.func @transform_0(%arg0: i32) -> (i32, i32) {
    %c0_i32 = arith.constant 0 : i32
    %c0_i32_0 = arith.constant 0 : i32
    %c0_i32_1 = arith.constant 0 : i32
    return %c0_i32, %c0_i32_0 : i32, i32
  }
  func.func @transform_1(%arg0: i32) -> (i32, i32) {
    %c0_i32 = arith.constant 0 : i32
    %c0_i32_0 = arith.constant 0 : i32
    %c0_i32_1 = arith.constant 0 : i32
    return %c0_i32, %c0_i32_0 : i32, i32
  }
  func.func @transform_2(%arg0: i32) -> (i32, i32) {
    %c0_i32 = arith.constant 0 : i32
    %c0_i32_0 = arith.constant 0 : i32
    %c0_i32_1 = arith.constant 0 : i32
    return %c0_i32, %c0_i32_0 : i32, i32
  }
  func.func @transform_3(%arg0: i32) -> (i32, i32) {
    %c0_i32 = arith.constant 0 : i32
    %c0_i32_0 = arith.constant 0 : i32
    %c0_i32_1 = arith.constant 0 : i32
    return %c0_i32, %c0_i32_0 : i32, i32
  }
  func.func @transform_4(%arg0: i32) -> (i32, i32) {
    %c0_i32 = arith.constant 0 : i32
    %c0_i32_0 = arith.constant 0 : i32
    %c0_i32_1 = arith.constant 0 : i32
    return %c0_i32, %c0_i32_0 : i32, i32
  }
}

module attributes {stable_mosaic.version = 11 : i64} {
  func.func @gpt2_stack_kernel(%arg0: i32, %arg1: i32, %arg2: memref<1x8x32xf32, #tpu.memory_space<vmem>>, %arg3: memref<1x1x32xf32, #tpu.memory_space<vmem>>, %arg4: memref<1x1x32xf32, #tpu.memory_space<vmem>>, %arg5: memref<1x32x96xbf16, #tpu.memory_space<vmem>>, %arg6: memref<1x1x96xf32, #tpu.memory_space<vmem>>, %arg7: memref<1x32x32xbf16, #tpu.memory_space<vmem>>, %arg8: memref<1x1x32xf32, #tpu.memory_space<vmem>>, %arg9: memref<1x1x32xf32, #tpu.memory_space<vmem>>, %arg10: memref<1x1x32xf32, #tpu.memory_space<vmem>>, %arg11: memref<1x32x128xbf16, #tpu.memory_space<vmem>>, %arg12: memref<1x1x128xf32, #tpu.memory_space<vmem>>, %arg13: memref<1x128x32xbf16, #tpu.memory_space<vmem>>, %arg14: memref<1x1x32xf32, #tpu.memory_space<vmem>>, %arg15: memref<1x8x32xf32, #tpu.memory_space<vmem>>) attributes {dimension_semantics = [#tpu.dimension_semantics<parallel>, #tpu.dimension_semantics<arbitrary>], iteration_bounds = array<i64: 2, 2>, scalar_prefetch = 0 : i64, scratch_operands = 0 : i64, tpu.core_type = #tpu.core_type<tc>, window_params = [{transform_indices = @transform_0, window_bounds = array<i64: 1, 8, 32>}, {transform_indices = @transform_1, window_bounds = array<i64: 1, 1, 32>}, {transform_indices = @transform_2, window_bounds = array<i64: 1, 1, 32>}, {transform_indices = @transform_3, window_bounds = array<i64: 1, 32, 96>}, {transform_indices = @transform_4, window_bounds = array<i64: 1, 1, 96>}, {transform_indices = @transform_5, window_bounds = array<i64: 1, 32, 32>}, {transform_indices = @transform_6, window_bounds = array<i64: 1, 1, 32>}, {transform_indices = @transform_7, window_bounds = array<i64: 1, 1, 32>}, {transform_indices = @transform_8, window_bounds = array<i64: 1, 1, 32>}, {transform_indices = @transform_9, window_bounds = array<i64: 1, 32, 128>}, {transform_indices = @transform_10, window_bounds = array<i64: 1, 1, 128>}, {transform_indices = @transform_11, window_bounds = array<i64: 1, 128, 32>}, {transform_indices = @transform_12, window_bounds = array<i64: 1, 1, 32>}, {transform_indices = @transform_13, window_bounds = array<i64: 1, 8, 32>}]} {
    %c0_i32 = arith.constant 0 : i32
    %0 = arith.cmpi eq, %arg1, %c0_i32 : i32
    %1 = arith.extui %0 : i1 to i32
    %c0_i32_0 = arith.constant 0 : i32
    %2 = arith.cmpi ne, %1, %c0_i32_0 : i32
    scf.if %2 {
      %c0_65 = arith.constant 0 : index
      %c0_66 = arith.constant 0 : index
      %c0_67 = arith.constant 0 : index
      %145 = vector.load %arg2[%c0_65, %c0_66, %c0_67] : memref<1x8x32xf32, #tpu.memory_space<vmem>>, vector<1x8x32xf32>
      %146 = vector.shape_cast %145 : vector<1x8x32xf32> to vector<8x32xf32>
      %c0_68 = arith.constant 0 : index
      %c0_69 = arith.constant 0 : index
      %c0_70 = arith.constant 0 : index
      %147 = vector.load %arg15[%c0_68, %c0_69, %c0_70] : memref<1x8x32xf32, #tpu.memory_space<vmem>>, vector<1x8x32xf32>
      %148 = vector.shape_cast %147 : vector<1x8x32xf32> to vector<8x32xf32>
      %149 = vector.shape_cast %146 : vector<8x32xf32> to vector<1x8x32xf32>
      tpu.vector_store %arg15[%c0_68, %c0_69, %c0_70], %149 {strides = array<i32>} : memref<1x8x32xf32, #tpu.memory_space<vmem>>, vector<1x8x32xf32>,
    } else {
    }
    %c0 = arith.constant 0 : index
    %c0_1 = arith.constant 0 : index
    %c0_2 = arith.constant 0 : index
    %3 = vector.load %arg15[%c0, %c0_1, %c0_2] : memref<1x8x32xf32, #tpu.memory_space<vmem>>, vector<1x8x32xf32>
    %4 = vector.shape_cast %3 : vector<1x8x32xf32> to vector<8x32xf32>
    %c0_3 = arith.constant 0 : index
    %c0_4 = arith.constant 0 : index
    %c0_5 = arith.constant 0 : index
    %5 = vector.load %arg3[%c0_3, %c0_4, %c0_5] : memref<1x1x32xf32, #tpu.memory_space<vmem>>, vector<1x1x32xf32>
    %6 = vector.shape_cast %5 : vector<1x1x32xf32> to vector<1x32xf32>
    %c0_6 = arith.constant 0 : index
    %c0_7 = arith.constant 0 : index
    %c0_8 = arith.constant 0 : index
    %7 = vector.load %arg4[%c0_6, %c0_7, %c0_8] : memref<1x1x32xf32, #tpu.memory_space<vmem>>, vector<1x1x32xf32>
    %8 = vector.shape_cast %7 : vector<1x1x32xf32> to vector<1x32xf32>
    %cst = arith.constant dense<0.000000e+00> : vector<8xf32>
    %9 = vector.multi_reduction <add>, %4, %cst [1] : vector<8x32xf32> to vector<8xf32>
    %10 = vector.shape_cast %9 : vector<8xf32> to vector<8x1xf32>
    %cst_9 = arith.constant 3.200000e+01 : f32
    %11 = vector.broadcast %cst_9 : f32 to vector<8x1xf32>
    %12 = arith.divf %10, %11 : vector<8x1xf32>
    %13 = vector.broadcast %12 : vector<8x1xf32> to vector<8x32xf32>
    %14 = arith.subf %4, %13 : vector<8x32xf32>
    %15 = arith.mulf %14, %14 : vector<8x32xf32>
    %cst_10 = arith.constant dense<0.000000e+00> : vector<8xf32>
    %16 = vector.multi_reduction <add>, %15, %cst_10 [1] : vector<8x32xf32> to vector<8xf32>
    %17 = vector.shape_cast %16 : vector<8xf32> to vector<8x1xf32>
    %cst_11 = arith.constant 3.200000e+01 : f32
    %18 = vector.broadcast %cst_11 : f32 to vector<8x1xf32>
    %19 = arith.divf %17, %18 : vector<8x1xf32>
    %20 = vector.broadcast %12 : vector<8x1xf32> to vector<8x32xf32>
    %21 = arith.subf %4, %20 : vector<8x32xf32>
    %cst_12 = arith.constant 9.99999974E-6 : f32
    %22 = vector.broadcast %cst_12 : f32 to vector<8x1xf32>
    %23 = arith.addf %19, %22 : vector<8x1xf32>
    %24 = math.rsqrt %23 : vector<8x1xf32>
    %25 = vector.broadcast %24 : vector<8x1xf32> to vector<8x32xf32>
    %26 = arith.mulf %21, %25 : vector<8x32xf32>
    %27 = vector.broadcast %6 : vector<1x32xf32> to vector<8x32xf32>
    %28 = arith.mulf %26, %27 : vector<8x32xf32>
    %29 = vector.broadcast %8 : vector<1x32xf32> to vector<8x32xf32>
    %30 = arith.addf %28, %29 : vector<8x32xf32>
    %31 = arith.truncf %30 : vector<8x32xf32> to vector<8x32xbf16>
    %c0_13 = arith.constant 0 : index
    %c0_14 = arith.constant 0 : index
    %c0_15 = arith.constant 0 : index
    %32 = vector.load %arg5[%c0_13, %c0_14, %c0_15] : memref<1x32x96xbf16, #tpu.memory_space<vmem>>, vector<1x32x96xbf16>
    %33 = vector.shape_cast %32 : vector<1x32x96xbf16> to vector<32x96xbf16>
    %cst_16 = arith.constant dense<0.000000e+00> : vector<8x96xf32>
    %34 = tpu.matmul %31, %33, %cst_16 {dimension_numbers = #tpu.dot_dimension_numbers<[1], [0], [0], [1], [0, 0, 1, 1], [], []>} : vector<8x32xbf16>, vector<32x96xbf16>, vector<8x96xf32> -> vector<8x96xf32>
    %c0_17 = arith.constant 0 : index
    %c0_18 = arith.constant 0 : index
    %c0_19 = arith.constant 0 : index
    %35 = vector.load %arg6[%c0_17, %c0_18, %c0_19] : memref<1x1x96xf32, #tpu.memory_space<vmem>>, vector<1x1x96xf32>
    %36 = vector.shape_cast %35 : vector<1x1x96xf32> to vector<1x96xf32>
    %37 = vector.broadcast %36 : vector<1x96xf32> to vector<8x96xf32>
    %38 = arith.addf %34, %37 : vector<8x96xf32>
    %39 = vector.extract_strided_slice %38 {offsets = [0, 0], sizes = [8, 32], strides = [1, 1]} : vector<8x96xf32> to vector<8x32xf32>
    %cst_20 = arith.constant 0.353553385 : f32
    %40 = vector.broadcast %cst_20 : f32 to vector<8x32xf32>
    %41 = arith.mulf %39, %40 : vector<8x32xf32>
    %42 = vector.shape_cast %41 : vector<8x32xf32> to vector<8x4x8xf32>
    %43 = vector.extract_strided_slice %38 {offsets = [0, 32], sizes = [8, 32], strides = [1, 1]} : vector<8x96xf32> to vector<8x32xf32>
    %44 = vector.shape_cast %43 : vector<8x32xf32> to vector<8x4x8xf32>
    %45 = vector.extract_strided_slice %38 {offsets = [0, 64], sizes = [8, 32], strides = [1, 1]} : vector<8x96xf32> to vector<8x32xf32>
    %46 = vector.shape_cast %45 : vector<8x32xf32> to vector<8x4x8xf32>
    %47 = tpu.transpose %42, [1, 0, 2] : vector<8x4x8xf32> -> vector<4x8x8xf32>
    %48 = arith.truncf %47 : vector<4x8x8xf32> to vector<4x8x8xbf16>
    %49 = tpu.transpose %44, [1, 0, 2] : vector<8x4x8xf32> -> vector<4x8x8xf32>
    %50 = arith.truncf %49 : vector<4x8x8xf32> to vector<4x8x8xbf16>
    %51 = tpu.transpose %46, [1, 0, 2] : vector<8x4x8xf32> -> vector<4x8x8xf32>
    %52 = arith.truncf %51 : vector<4x8x8xf32> to vector<4x8x8xbf16>
    "tpu.trace_start"() <{level = 10 : i32, message = "hqe,hke->hqk"}> : () -> ()
    %cst_21 = arith.constant dense<0.000000e+00> : vector<4x8x8xf32>
    %53 = tpu.matmul %48, %50, %cst_21 {dimension_numbers = #tpu.dot_dimension_numbers<[2], [2], [1], [1], [0, 0, 0, 1, 1, 1], [0], [0]>} : vector<4x8x8xbf16>, vector<4x8x8xbf16>, vector<4x8x8xf32> -> vector<4x8x8xf32>
    "tpu.trace_stop"() : () -> ()
    %54 = tpu.iota {dimensions = array<i32: 0>} : vector<8x8xi32>
    %55 = tpu.iota {dimensions = array<i32: 1>} : vector<8x8xi32>
    %56 = arith.cmpi sle, %55, %54 : vector<8x8xi32>
    %57 = vector.shape_cast %56 : vector<8x8xi1> to vector<1x8x8xi1>
    %cst_22 = arith.constant -1.000000e+30 : f32
    %58 = vector.shape_cast %57 : vector<1x8x8xi1> to vector<1x8x8xi1>
    %59 = vector.broadcast %58 : vector<1x8x8xi1> to vector<4x8x8xi1>
    %60 = vector.broadcast %cst_22 : f32 to vector<4x8x8xf32>
    %61 = arith.select %59, %53, %60 : vector<4x8x8xi1>, vector<4x8x8xf32>
    %cst_23 = arith.constant dense<0xFF800000> : vector<4x8xf32>
    %62 = vector.multi_reduction <maximumf>, %61, %cst_23 [2] : vector<4x8x8xf32> to vector<4x8xf32>
    %63 = vector.shape_cast %62 : vector<4x8xf32> to vector<4x8x1xf32>
    %64 = vector.broadcast %63 : vector<4x8x1xf32> to vector<4x8x8xf32>
    %65 = arith.subf %61, %64 : vector<4x8x8xf32>
    %66 = math.exp %65 : vector<4x8x8xf32>
    %cst_24 = arith.constant dense<0.000000e+00> : vector<4x8xf32>
    %67 = vector.multi_reduction <add>, %66, %cst_24 [2] : vector<4x8x8xf32> to vector<4x8xf32>
    %68 = vector.shape_cast %67 : vector<4x8xf32> to vector<4x8x1xf32>
    %69 = tpu.reciprocal %68 {approx = true} : vector<4x8x1xf32> -> vector<4x8x1xf32>
    %70 = vector.broadcast %69 : vector<4x8x1xf32> to vector<4x8x8xf32>
    %71 = arith.mulf %66, %70 : vector<4x8x8xf32>
    %72 = arith.truncf %71 : vector<4x8x8xf32> to vector<4x8x8xbf16>
    "tpu.trace_start"() <{level = 10 : i32, message = "hqk,hke->hqe"}> : () -> ()
    %cst_25 = arith.constant dense<0.000000e+00> : vector<4x8x8xf32>
    %73 = tpu.matmul %72, %52, %cst_25 {dimension_numbers = #tpu.dot_dimension_numbers<[2], [1], [1], [2], [0, 0, 0, 1, 1, 2], [0], [0]>} : vector<4x8x8xbf16>, vector<4x8x8xbf16>, vector<4x8x8xf32> -> vector<4x8x8xf32>
    "tpu.trace_stop"() : () -> ()
    %74 = tpu.transpose %73, [1, 0, 2] : vector<4x8x8xf32> -> vector<8x4x8xf32>
    %75 = vector.shape_cast %74 : vector<8x4x8xf32> to vector<8x32xf32>
    %76 = arith.truncf %75 : vector<8x32xf32> to vector<8x32xbf16>
    %c0_26 = arith.constant 0 : index
    %c0_27 = arith.constant 0 : index
    %c0_28 = arith.constant 0 : index
    %77 = vector.load %arg7[%c0_26, %c0_27, %c0_28] : memref<1x32x32xbf16, #tpu.memory_space<vmem>>, vector<1x32x32xbf16>
    %78 = vector.shape_cast %77 : vector<1x32x32xbf16> to vector<32x32xbf16>
    %cst_29 = arith.constant dense<0.000000e+00> : vector<8x32xf32>
    %79 = tpu.matmul %76, %78, %cst_29 {dimension_numbers = #tpu.dot_dimension_numbers<[1], [0], [0], [1], [0, 0, 1, 1], [], []>} : vector<8x32xbf16>, vector<32x32xbf16>, vector<8x32xf32> -> vector<8x32xf32>
    %c0_30 = arith.constant 0 : index
    %c0_31 = arith.constant 0 : index
    %c0_32 = arith.constant 0 : index
    %80 = vector.load %arg8[%c0_30, %c0_31, %c0_32] : memref<1x1x32xf32, #tpu.memory_space<vmem>>, vector<1x1x32xf32>
    %81 = vector.shape_cast %80 : vector<1x1x32xf32> to vector<1x32xf32>
    %82 = vector.broadcast %81 : vector<1x32xf32> to vector<8x32xf32>
    %83 = arith.addf %79, %82 : vector<8x32xf32>
    %84 = arith.addf %4, %83 : vector<8x32xf32>
    %c0_33 = arith.constant 0 : index
    %c0_34 = arith.constant 0 : index
    %c0_35 = arith.constant 0 : index
    %85 = vector.load %arg9[%c0_33, %c0_34, %c0_35] : memref<1x1x32xf32, #tpu.memory_space<vmem>>, vector<1x1x32xf32>
    %86 = vector.shape_cast %85 : vector<1x1x32xf32> to vector<1x32xf32>
    %c0_36 = arith.constant 0 : index
    %c0_37 = arith.constant 0 : index
    %c0_38 = arith.constant 0 : index
    %87 = vector.load %arg10[%c0_36, %c0_37, %c0_38] : memref<1x1x32xf32, #tpu.memory_space<vmem>>, vector<1x1x32xf32>
    %88 = vector.shape_cast %87 : vector<1x1x32xf32> to vector<1x32xf32>
    %cst_39 = arith.constant dense<0.000000e+00> : vector<8xf32>
    %89 = vector.multi_reduction <add>, %84, %cst_39 [1] : vector<8x32xf32> to vector<8xf32>
    %90 = vector.shape_cast %89 : vector<8xf32> to vector<8x1xf32>
    %cst_40 = arith.constant 3.200000e+01 : f32
    %91 = vector.broadcast %cst_40 : f32 to vector<8x1xf32>
    %92 = arith.divf %90, %91 : vector<8x1xf32>
    %93 = vector.broadcast %92 : vector<8x1xf32> to vector<8x32xf32>
    %94 = arith.subf %84, %93 : vector<8x32xf32>
    %95 = arith.mulf %94, %94 : vector<8x32xf32>
    %cst_41 = arith.constant dense<0.000000e+00> : vector<8xf32>
    %96 = vector.multi_reduction <add>, %95, %cst_41 [1] : vector<8x32xf32> to vector<8xf32>
    %97 = vector.shape_cast %96 : vector<8xf32> to vector<8x1xf32>
    %cst_42 = arith.constant 3.200000e+01 : f32
    %98 = vector.broadcast %cst_42 : f32 to vector<8x1xf32>
    %99 = arith.divf %97, %98 : vector<8x1xf32>
    %100 = vector.broadcast %92 : vector<8x1xf32> to vector<8x32xf32>
    %101 = arith.subf %84, %100 : vector<8x32xf32>
    %cst_43 = arith.constant 9.99999974E-6 : f32
    %102 = vector.broadcast %cst_43 : f32 to vector<8x1xf32>
    %103 = arith.addf %99, %102 : vector<8x1xf32>
    %104 = math.rsqrt %103 : vector<8x1xf32>
    %105 = vector.broadcast %104 : vector<8x1xf32> to vector<8x32xf32>
    %106 = arith.mulf %101, %105 : vector<8x32xf32>
    %107 = vector.broadcast %86 : vector<1x32xf32> to vector<8x32xf32>
    %108 = arith.mulf %106, %107 : vector<8x32xf32>
    %109 = vector.broadcast %88 : vector<1x32xf32> to vector<8x32xf32>
    %110 = arith.addf %108, %109 : vector<8x32xf32>
    %111 = arith.truncf %110 : vector<8x32xf32> to vector<8x32xbf16>
    %c0_44 = arith.constant 0 : index
    %c0_45 = arith.constant 0 : index
    %c0_46 = arith.constant 0 : index
    %112 = vector.load %arg11[%c0_44, %c0_45, %c0_46] : memref<1x32x128xbf16, #tpu.memory_space<vmem>>, vector<1x32x128xbf16>
    %113 = vector.shape_cast %112 : vector<1x32x128xbf16> to vector<32x128xbf16>
    %cst_47 = arith.constant dense<0.000000e+00> : vector<8x128xf32>
    %114 = tpu.matmul %111, %113, %cst_47 {dimension_numbers = #tpu.dot_dimension_numbers<[1], [0], [0], [1], [0, 0, 1, 1], [], []>} : vector<8x32xbf16>, vector<32x128xbf16>, vector<8x128xf32> -> vector<8x128xf32>
    %c0_48 = arith.constant 0 : index
    %c0_49 = arith.constant 0 : index
    %c0_50 = arith.constant 0 : index
    %115 = vector.load %arg12[%c0_48, %c0_49, %c0_50] : memref<1x1x128xf32, #tpu.memory_space<vmem>>, vector<1x1x128xf32>
    %116 = vector.shape_cast %115 : vector<1x1x128xf32> to vector<1x128xf32>
    %117 = vector.broadcast %116 : vector<1x128xf32> to vector<8x128xf32>
    %118 = arith.addf %114, %117 : vector<8x128xf32>
    %cst_51 = arith.constant 5.000000e-01 : f32
    %119 = vector.broadcast %cst_51 : f32 to vector<8x128xf32>
    %120 = arith.mulf %119, %118 : vector<8x128xf32>
    %cst_52 = arith.constant 0.636619746 : f32
    %121 = math.sqrt %cst_52 : f32
    %cst_53 = arith.constant 4.471500e-02 : f32
    %122 = vector.broadcast %cst_53 : f32 to vector<8x128xf32>
    %123 = arith.mulf %122, %118 : vector<8x128xf32>
    %124 = arith.mulf %123, %118 : vector<8x128xf32>
    %125 = arith.mulf %124, %118 : vector<8x128xf32>
    %126 = arith.addf %118, %125 : vector<8x128xf32>
    %127 = vector.broadcast %121 : f32 to vector<8x128xf32>
    %128 = arith.mulf %127, %126 : vector<8x128xf32>
    %129 = math.tanh %128 : vector<8x128xf32>
    %cst_54 = arith.constant 1.000000e+00 : f32
    %130 = vector.broadcast %cst_54 : f32 to vector<8x128xf32>
    %131 = arith.addf %130, %129 : vector<8x128xf32>
    %132 = arith.mulf %120, %131 : vector<8x128xf32>
    %133 = arith.truncf %132 : vector<8x128xf32> to vector<8x128xbf16>
    %c0_55 = arith.constant 0 : index
    %c0_56 = arith.constant 0 : index
    %c0_57 = arith.constant 0 : index
    %134 = vector.load %arg13[%c0_55, %c0_56, %c0_57] : memref<1x128x32xbf16, #tpu.memory_space<vmem>>, vector<1x128x32xbf16>
    %135 = vector.shape_cast %134 : vector<1x128x32xbf16> to vector<128x32xbf16>
    %cst_58 = arith.constant dense<0.000000e+00> : vector<8x32xf32>
    %136 = tpu.matmul %133, %135, %cst_58 {dimension_numbers = #tpu.dot_dimension_numbers<[1], [0], [0], [1], [0, 0, 1, 1], [], []>} : vector<8x128xbf16>, vector<128x32xbf16>, vector<8x32xf32> -> vector<8x32xf32>
    %c0_59 = arith.constant 0 : index
    %c0_60 = arith.constant 0 : index
    %c0_61 = arith.constant 0 : index
    %137 = vector.load %arg14[%c0_59, %c0_60, %c0_61] : memref<1x1x32xf32, #tpu.memory_space<vmem>>, vector<1x1x32xf32>
    %138 = vector.shape_cast %137 : vector<1x1x32xf32> to vector<1x32xf32>
    %139 = vector.broadcast %138 : vector<1x32xf32> to vector<8x32xf32>
    %140 = arith.addf %136, %139 : vector<8x32xf32>
    %141 = arith.addf %84, %140 : vector<8x32xf32>
    %c0_62 = arith.constant 0 : index
    %c0_63 = arith.constant 0 : index
    %c0_64 = arith.constant 0 : index
    %142 = vector.load %arg15[%c0_62, %c0_63, %c0_64] : memref<1x8x32xf32, #tpu.memory_space<vmem>>, vector<1x8x32xf32>
    %143 = vector.shape_cast %142 : vector<1x8x32xf32> to vector<8x32xf32>
    %144 = vector.shape_cast %141 : vector<8x32xf32> to vector<1x8x32xf32>
    tpu.vector_store %arg15[%c0_62, %c0_63, %c0_64], %144 {strides = array<i32>} : memref<1x8x32xf32, #tpu.memory_space<vmem>>, vector<1x8x32xf32>,
    return
  }
  func.func @transform_0(%arg0: i32, %arg1: i32) -> (i32, i32, i32) {
    %c0_i32 = arith.constant 0 : i32
    %c0_i32_0 = arith.constant 0 : i32
    %c0_i32_1 = arith.constant 0 : i32
    return %arg0, %c0_i32, %c0_i32_0 : i32, i32, i32
  }
  func.func @transform_1(%arg0: i32, %arg1: i32) -> (i32, i32, i32) {
    %c0_i32 = arith.constant 0 : i32
    %c0_i32_0 = arith.constant 0 : i32
    %c0_i32_1 = arith.constant 0 : i32
    return %arg1, %c0_i32, %c0_i32_0 : i32, i32, i32
  }
  func.func @transform_2(%arg0: i32, %arg1: i32) -> (i32, i32, i32) {
    %c0_i32 = arith.constant 0 : i32
    %c0_i32_0 = arith.constant 0 : i32
    %c0_i32_1 = arith.constant 0 : i32
    return %arg1, %c0_i32, %c0_i32_0 : i32, i32, i32
  }
  func.func @transform_3(%arg0: i32, %arg1: i32) -> (i32, i32, i32) {
    %c0_i32 = arith.constant 0 : i32
    %c0_i32_0 = arith.constant 0 : i32
    %c0_i32_1 = arith.constant 0 : i32
    return %arg1, %c0_i32, %c0_i32_0 : i32, i32, i32
  }
  func.func @transform_4(%arg0: i32, %arg1: i32) -> (i32, i32, i32) {
    %c0_i32 = arith.constant 0 : i32
    %c0_i32_0 = arith.constant 0 : i32
    %c0_i32_1 = arith.constant 0 : i32
    return %arg1, %c0_i32, %c0_i32_0 : i32, i32, i32
  }
  func.func @transform_5(%arg0: i32, %arg1: i32) -> (i32, i32, i32) {
    %c0_i32 = arith.constant 0 : i32
    %c0_i32_0 = arith.constant 0 : i32
    %c0_i32_1 = arith.constant 0 : i32
    return %arg1, %c0_i32, %c0_i32_0 : i32, i32, i32
  }
  func.func @transform_6(%arg0: i32, %arg1: i32) -> (i32, i32, i32) {
    %c0_i32 = arith.constant 0 : i32
    %c0_i32_0 = arith.constant 0 : i32
    %c0_i32_1 = arith.constant 0 : i32
    return %arg1, %c0_i32, %c0_i32_0 : i32, i32, i32
  }
  func.func @transform_7(%arg0: i32, %arg1: i32) -> (i32, i32, i32) {
    %c0_i32 = arith.constant 0 : i32
    %c0_i32_0 = arith.constant 0 : i32
    %c0_i32_1 = arith.constant 0 : i32
    return %arg1, %c0_i32, %c0_i32_0 : i32, i32, i32
  }
  func.func @transform_8(%arg0: i32, %arg1: i32) -> (i32, i32, i32) {
    %c0_i32 = arith.constant 0 : i32
    %c0_i32_0 = arith.constant 0 : i32
    %c0_i32_1 = arith.constant 0 : i32
    return %arg1, %c0_i32, %c0_i32_0 : i32, i32, i32
  }
  func.func @transform_9(%arg0: i32, %arg1: i32) -> (i32, i32, i32) {
    %c0_i32 = arith.constant 0 : i32
    %c0_i32_0 = arith.constant 0 : i32
    %c0_i32_1 = arith.constant 0 : i32
    return %arg1, %c0_i32, %c0_i32_0 : i32, i32, i32
  }
  func.func @transform_10(%arg0: i32, %arg1: i32) -> (i32, i32, i32) {
    %c0_i32 = arith.constant 0 : i32
    %c0_i32_0 = arith.constant 0 : i32
    %c0_i32_1 = arith.constant 0 : i32
    return %arg1, %c0_i32, %c0_i32_0 : i32, i32, i32
  }
  func.func @transform_11(%arg0: i32, %arg1: i32) -> (i32, i32, i32) {
    %c0_i32 = arith.constant 0 : i32
    %c0_i32_0 = arith.constant 0 : i32
    %c0_i32_1 = arith.constant 0 : i32
    return %arg1, %c0_i32, %c0_i32_0 : i32, i32, i32
  }
  func.func @transform_12(%arg0: i32, %arg1: i32) -> (i32, i32, i32) {
    %c0_i32 = arith.constant 0 : i32
    %c0_i32_0 = arith.constant 0 : i32
    %c0_i32_1 = arith.constant 0 : i32
    return %arg1, %c0_i32, %c0_i32_0 : i32, i32, i32
  }
  func.func @transform_13(%arg0: i32, %arg1: i32) -> (i32, i32, i32) {
    %c0_i32 = arith.constant 0 : i32
    %c0_i32_0 = arith.constant 0 : i32
    %c0_i32_1 = arith.constant 0 : i32
    return %arg0, %c0_i32, %c0_i32_0 : i32, i32, i32
  }
}

</mosaic_0001>

<llo_original>
// kernel: my_gpt2_forward.3
$region0: #{my_gpt2_forward.3}
  #allocation0 [shape = 'u32[]', space=smem, size = 0x4, offset = 0x4, fixed_abs, tag = 'smem constant byte address 0x4 - core index']
  #allocation1 [shape = 'u32[144,128]{1,0:T(1,128)}', space=vmem, size = 0x12000, scoped, tag = 'internal scratch']
  %s0 = inlined_call_operand.vmem [shape: f32[2,32], index: 0, kind: input, shape index: {}]
  %s1 = inlined_call_operand.vmem [shape: f32[1,32], index: 1, kind: input, shape index: {}]
  %s2 = inlined_call_operand.vmem [shape: f32[1,32], index: 2, kind: input, shape index: {}]
  %s3 = inlined_call_operand.vmem [shape: f32[32,2], index: 3, kind: input, shape index: {}]
  %s4 = inlined_call_operand.hbm [shape: f32[2,2], index: 4, kind: output, shape index: {}]
  %s5 = sld [smem:[#allocation0]]
  $region26: #{my_gpt2_forward.3} parent=0
    _
  %s7 = ssub.s32 1, %s5
  %s8 = scalar_select 0, %s7, %s5
  $region1: #{my_gpt2_forward.3} parent=0
    #allocation2 [shape = 'u8[1024]{0}', space=vmem, size = 0x400, scoped, tag = 'output window, operand 0, single buffered']
    #allocation3 [shape = 's32[1]{0}', space=sflag, size = 0x4, scoped, tag = 'scoped memory for my_gpt2_forward.3']
    %9 = vsyncpa [#allocation3], 0
    // Predicated region
    $region2: #{my_gpt2_forward.3} parent=1 // pred_check
      _
    $region3: #{my_gpt2_forward.3} parent=1 // pred_check_branch
      %11 = sbr.rel (0) target = $region5
    $region4: #{my_gpt2_forward.3} parent=1 // pred_region
      _
    $region5: #{my_gpt2_forward.3} parent=1 // pred_fallthru
      _
    // Predicated region
    $region6: #{my_gpt2_forward.3} parent=1 // pred_check
      _
    $region7: #{my_gpt2_forward.3} parent=1 // pred_check_branch
      %13 = sbr.rel (0) target = $region9
    $region8: #{my_gpt2_forward.3} parent=1 // pred_region
      _
    $region9: #{my_gpt2_forward.3} parent=1 // pred_fallthru
      _
    // Predicated region
    $region10: #{my_gpt2_forward.3} parent=1 // pred_check
      _
    $region11: #{my_gpt2_forward.3} parent=1 // pred_check_branch
      %15 = sbr.rel (0) target = $region13
    $region12: #{my_gpt2_forward.3} parent=1 // pred_region
      _
    $region13: #{my_gpt2_forward.3} parent=1 // pred_fallthru
      _
    // Predicated region
    $region14: #{my_gpt2_forward.3} parent=1 // pred_check
      _
    $region15: #{my_gpt2_forward.3} parent=1 // pred_check_branch
      %17 = sbr.rel (0) target = $region17
    $region16: #{my_gpt2_forward.3} parent=1 // pred_region
      _
    $region17: #{my_gpt2_forward.3} parent=1 // pred_fallthru
      _
    %v18 = vld [vmem:[%s0] sm:$0x3]
    %v19 = vld [vmem:[%s1] sm:$0x1]
    %v20 = vld [vmem:[%s2] sm:$0x1]
    %vm21 = vcmask 254976
    %v22 = vsel %vm21, %v18, 0.0
    %23 = vadd.xlane.f32.xlu0 %v22
    %v24 = vpop.xlane.xlu0 %23
    %v25 = vrcp.pop 32.0
    %v26 = vmul.f32 %v24, %v25
    %v27 = vsub.f32 %v18, %v26
    %v28 = vmul.f32 %v27, %v27
    %v29 = vsel %vm21, %v28, 0.0
    %30 = vadd.xlane.f32.xlu0 %v29
    %v31 = vpop.xlane.xlu0 %30
    %v32 = vmul.f32 %v31, %v25
    %v33 = vadd.f32 %v32, 1e-05
    %v34 = vrsqrt.pop %v33
    %v35 = vmul.f32 %v27, %v34
    %v37 = vlaneseq
    %v38 = vshrl.u32 %v37, 7
    %v39 = vsub.s32 0, %v38
    %v40 = vrot.slane %v19, %v39
    %v42 = vmul.f32 %v35, %v40
    %v44 = vlaneseq
    %v45 = vshrl.u32 %v44, 7
    %v46 = vsub.s32 0, %v45
    %v47 = vrot.slane %v20, %v46
    %v49 = vadd.f32 %v42, %v47
    %v50 = vld [vmem:[%s3] sm:$0xff]
    %v51 = vld [vmem:[%s3 + $0x8] sm:$0xff]
    %v52 = vld [vmem:[%s3 + $0x10] sm:$0xff]
    %v53 = vld [vmem:[%s3 + $0x18] sm:$0xff]
    %vm54 = vcmask 261120
    %v56 = vsel %vm54, %v49, 0
    %58 = vmatprep.subr.mxu0 0.0
    %59 = vmatpush1.msra.mxu0 0.0
    %60 = vmatprep.subr.mxu0 0.0
    %61 = vmatpush1.msra.mxu0 0.0
    %62 = vmatprep.subr.mxu0 0.0
    %63 = vmatpush1.msra.mxu0 0.0
    %64 = vmatprep.subr.mxu0 0.0
    %65 = vmatpush1.msra.mxu0 0.0
    %66 = vmatprep.subr.mxu0 0.0
    %67 = vmatpush1.msra.mxu0 0.0
    %68 = vmatprep.subr.mxu0 0.0
    %69 = vmatpush1.msra.mxu0 0.0
    %70 = vmatprep.subr.mxu0 0.0
    %71 = vmatpush1.msra.mxu0 0.0
    %72 = vmatprep.subr.mxu0 0.0
    %73 = vmatpush1.msra.mxu0 0.0
    %74 = vmatprep.subr.mxu0 0.0
    %75 = vmatpush1.msra.mxu0 0.0
    %76 = vmatprep.subr.mxu0 0.0
    %77 = vmatpush1.msra.mxu0 0.0
    %78 = vmatprep.subr.mxu0 0.0
    %79 = vmatpush1.msra.mxu0 0.0
    %80 = vmatprep.subr.mxu0 0.0
    %81 = vmatpush1.msra.mxu0 0.0
    %82 = vmatprep.subr.mxu0 0.0
    %83 = vmatpush1.msra.mxu0 %v53
    %84 = vmatprep.subr.mxu0 0.0
    %85 = vmatpush1.msra.mxu0 %v52
    %86 = vmatprep.subr.mxu0 0.0
    %87 = vmatpush1.msra.mxu0 %v51
    %88 = vmatprep.subr.mxu0 0.0
    %89 = vmatpush1.msra.mxu0 %v50
    %90 = vmatprep.subr.mxu0 0.0
    %91 = vmatpush2.msra.mxu0 0.0
    %92 = vmatprep.subr.mxu0 0.0
    %93 = vmatpush2.msra.mxu0 0.0
    %94 = vmatprep.subr.mxu0 0.0
    %95 = vmatpush2.msra.mxu0 0.0
    %96 = vmatprep.subr.mxu0 0.0
    %97 = vmatpush2.msra.mxu0 0.0
    %98 = vmatprep.subr.mxu0 0.0
    %99 = vmatpush2.msra.mxu0 0.0
    %100 = vmatprep.subr.mxu0 0.0
    %101 = vmatpush2.msra.mxu0 0.0
    %102 = vmatprep.subr.mxu0 0.0
    %103 = vmatpush2.msra.mxu0 0.0
    %104 = vmatprep.subr.mxu0 0.0
    %105 = vmatpush2.msra.mxu0 0.0
    %106 = vmatprep.subr.mxu0 0.0
    %107 = vmatpush2.msra.mxu0 0.0
    %108 = vmatprep.subr.mxu0 0.0
    %109 = vmatpush2.msra.mxu0 0.0
    %110 = vmatprep.subr.mxu0 0.0
    %111 = vmatpush2.msra.mxu0 0.0
    %112 = vmatprep.subr.mxu0 0.0
    %113 = vmatpush2.msra.mxu0 0.0
    %114 = vmatprep.subr.mxu0 0.0
    %115 = vmatpush2.msra.mxu0 0.0
    %116 = vmatprep.subr.mxu0 0.0
    %117 = vmatpush2.msra.mxu0 0.0
    %118 = vmatprep.subr.mxu0 0.0
    %119 = vmatpush2.msra.mxu0 0.0
    %120 = vmatprep.subr.mxu0 0.0
    %121 = vmatpush2.msra.mxu0 0.0
    %122 = vmatprep.mubr.f32.mxu0 0.0
    %123 = vmatmul.mubr.f32.gmra.mxu0 %v56
    %v124 = vpop.f32.mrf.mxu0
    %v125 = vadd.f32 0.0, %v124
    %v126 = vpop.f32.mrf.mxu0
    %127 = vdwg.mxu0
    %vm128 = vcmask 9216
    %129 = vst.msk [vmem:[#allocation2] sm:$0x3] %vm128, %v125
    // Predicated region
    $region18: #{my_gpt2_forward.3} parent=1 // pred_check
      _
    $region19: #{my_gpt2_forward.3} parent=1 // pred_check_branch
      %131 = sbr.rel (0) target = $region21
    $region20: #{my_gpt2_forward.3} parent=1 // pred_region
      %s133 = ssub.s32 32, 32
      %134 = vsyncadd [#allocation3], %s133
      %s136 = sshll.u32 [#allocation2], 4
      %s137 = int_to_ptr.vmem [resolvable:$true] %s136
      %139 = dma.vmem_to_hbm [thread:$0]  %s137, 32, %s4, [#allocation3]
    $region21: #{my_gpt2_forward.3} parent=1 // pred_fallthru
      _
    // Predicated region
    $region22: #{my_gpt2_forward.3} parent=1 // pred_check
      _
    $region23: #{my_gpt2_forward.3} parent=1 // pred_check_branch
      %141 = sbr.rel (0) target = $region25
    $region24: #{my_gpt2_forward.3} parent=1 // pred_region
      %142 = dma.done [#allocation3], 32
    $region25: #{my_gpt2_forward.3} parent=1 // pred_fallthru
      _
    %143 = vsyncpa [#allocation3], 1

// kernel: my_gpt2_forward.2
$region0: #{my_gpt2_forward.2}
  #allocation0 [shape = 'u32[]', space=smem, size = 0x4, offset = 0x4, fixed_abs, tag = 'smem constant byte address 0x4 - core index']
  #allocation1 [shape = 'u32[144,128]{1,0:T(1,128)}', space=vmem, size = 0x12000, scoped, tag = 'internal scratch']
  %s0 = inlined_call_operand.vmem [shape: f32[2,8,32], index: 0, kind: input, shape index: {}]
  %s1 = inlined_call_operand.vmem [shape: f32[2,1,32], index: 1, kind: input, shape index: {}]
  %s2 = inlined_call_operand.vmem [shape: f32[2,1,32], index: 2, kind: input, shape index: {}]
  %s3 = inlined_call_operand.vmem [shape: bf16[2,32,96], index: 3, kind: input, shape index: {}]
  %s4 = inlined_call_operand.vmem [shape: f32[2,1,96], index: 4, kind: input, shape index: {}]
  %s5 = inlined_call_operand.vmem [shape: bf16[2,32,32], index: 5, kind: input, shape index: {}]
  %s6 = inlined_call_operand.vmem [shape: f32[2,1,32], index: 6, kind: input, shape index: {}]
  %s7 = inlined_call_operand.vmem [shape: f32[2,1,32], index: 7, kind: input, shape index: {}]
  %s8 = inlined_call_operand.vmem [shape: f32[2,1,32], index: 8, kind: input, shape index: {}]
  %s9 = inlined_call_operand.vmem [shape: bf16[2,32,128], index: 9, kind: input, shape index: {}]
  %s10 = inlined_call_operand.vmem [shape: f32[2,1,128], index: 10, kind: input, shape index: {}]
  %s11 = inlined_call_operand.vmem [shape: bf16[2,128,32], index: 11, kind: input, shape index: {}]
  %s12 = inlined_call_operand.vmem [shape: f32[2,1,32], index: 12, kind: input, shape index: {}]
  %s13 = inlined_call_operand.vmem [shape: f32[2,8,32], index: 13, kind: output, shape index: {}]
  %s14 = sld [smem:[#allocation0]]
  $region89: #{my_gpt2_forward.2} parent=0
    _
  %s16 = ssub.s32 1, %s14
  %s17 = scalar_select 0, %s16, %s14
  loop: start=0, step=1, limit=6
  $region2: #{my_gpt2_forward.2} parent=0 // loop_pre_header
    _
  $region3: #{my_gpt2_forward.2} parent=0 // loop_header
    %s19 = sphi 0, %s23
    %p20 = scmp.ge.s32.totalorder %s19, 6
    %s26 = sphi 0, %s38
    %s27 = sphi 0, %s34
    %s28 = sphi 0, %s26
    %s29 = sphi 0, %s27
    %s30 = sphi 0, %s28
    %s31 = sphi 0, %s29
    %s41 = sphi 0, %s43
    %s44 = sphi 0, %s41
    %s45 = sphi 0, %s44
    %s61 = sphi 0, %s45
    %s67 = sphi 0, %s69
    %s70 = sphi 0, %s67
    %s71 = sphi 0, %s70
    %s87 = sphi 0, %s71
    %s93 = sphi 0, %s95
    %s96 = sphi 0, %s93
    %s97 = sphi 0, %s96
    %s113 = sphi 0, %s97
    %s119 = sphi 0, %s121
    %s122 = sphi 0, %s119
    %s123 = sphi 0, %s122
    %s139 = sphi 0, %s123
    %s145 = sphi 0, %s147
    %s148 = sphi 0, %s145
    %s149 = sphi 0, %s148
    %s165 = sphi 0, %s149
    %s171 = sphi 0, %s173
    %s174 = sphi 0, %s171
    %s175 = sphi 0, %s174
    %s191 = sphi 0, %s175
    %s197 = sphi 0, %s199
    %s200 = sphi 0, %s197
    %s201 = sphi 0, %s200
    %s217 = sphi 0, %s201
    %s223 = sphi 0, %s225
    %s226 = sphi 0, %s223
    %s227 = sphi 0, %s226
    %s243 = sphi 0, %s227
    %s249 = sphi 0, %s251
    %s252 = sphi 0, %s249
    %s253 = sphi 0, %s252
    %s269 = sphi 0, %s253
    %s275 = sphi 0, %s277
    %s278 = sphi 0, %s275
    %s279 = sphi 0, %s278
    %s295 = sphi 0, %s279
    %s301 = sphi 0, %s303
    %s304 = sphi 0, %s301
    %s305 = sphi 0, %s304
    %s321 = sphi 0, %s305
    %s327 = sphi 0, %s329
    %s330 = sphi 0, %s327
    %s331 = sphi 0, %s330
    %s347 = sphi 0, %s331
    %s353 = sphi 0, %s355
    %s356 = sphi 0, %s353
    %s357 = sphi 0, %s356
    %s373 = sphi 0, %s357
    %s379 = sphi 0, %s381
    %s382 = sphi 0, %s379
    %s383 = sphi 0, %s382
    %s399 = sphi 0, %s383
  $region4: #{my_gpt2_forward.2} parent=0 // loop_header_branch
    %22 = sbr.rel (%p20) target = $region8
  $region5: #{my_gpt2_forward.2} parent=0 // loop_body
    %s24 = ssub.s32 %s19, 1
    %s25 = ssub.s32 %s19, 2
    %s32 = sadd.s32 1, %s27
    %p33 = scmp.ge.s32.totalorder %s32, 2
    %s34 = scalar_select %p33, 0, %s32
    %s35 = sadd.s32 1, %s26
    %s36 = scalar_select %p33, %s35, %s26
    %p37 = scmp.ge.s32.totalorder %s36, 2
    %s38 = scalar_select %p37, 0, %s36
    %s39 = ssub.s32 %s26, %s38
    %p40 = scmp.eq.s32.totalorder %s39, 0
    %s42 = sadd.s32 %s41, 1
    %s43 = scalar_select %p40, %s41, %s42
    %p46 = pneg %p40
    %p47 = scmp.eq.s32.totalorder %s19, 3
    %p48 = por %p46, %p47
    %p49 = scmp.ne.s32.totalorder %s41, %s44
    %p50 = scmp.eq.s32.totalorder %s19, 0
    %p51 = por %p49, %p50
    %p52 = scmp.ne.s32.totalorder %s41, %s44
    %p53 = scmp.eq.s32.totalorder %s24, 3
    %p54 = por %p52, %p53
    %p55 = scmp.ne.s32.totalorder %s44, %s45
    %p56 = scmp.eq.s32.totalorder %s24, 0
    %p57 = por %p55, %p56
    %p58 = scmp.ne.s32.totalorder %s44, %s45
    %p59 = scmp.eq.s32.totalorder %s25, 3
    %p60 = por %p58, %p59
    %p62 = scmp.ne.s32.totalorder %s45, %s61
    %p63 = scmp.eq.s32.totalorder %s25, 0
    %p64 = por %p62, %p63
    %s65 = ssub.s32 %s27, %s34
    %p66 = scmp.eq.s32.totalorder %s65, 0
    %s68 = sadd.s32 %s67, 1
    %s69 = scalar_select %p66, %s67, %s68
    %p72 = pneg %p66
    %p73 = scmp.eq.s32.totalorder %s19, 3
    %p74 = por %p72, %p73
    %p75 = scmp.ne.s32.totalorder %s67, %s70
    %p76 = scmp.eq.s32.totalorder %s19, 0
    %p77 = por %p75, %p76
    %p78 = scmp.ne.s32.totalorder %s67, %s70
    %p79 = scmp.eq.s32.totalorder %s24, 3
    %p80 = por %p78, %p79
    %p81 = scmp.ne.s32.totalorder %s70, %s71
    %p82 = scmp.eq.s32.totalorder %s24, 0
    %p83 = por %p81, %p82
    %p84 = scmp.ne.s32.totalorder %s70, %s71
    %p85 = scmp.eq.s32.totalorder %s25, 3
    %p86 = por %p84, %p85
    %p88 = scmp.ne.s32.totalorder %s71, %s87
    %p89 = scmp.eq.s32.totalorder %s25, 0
    %p90 = por %p88, %p89
    %s91 = ssub.s32 %s27, %s34
    %p92 = scmp.eq.s32.totalorder %s91, 0
    %s94 = sadd.s32 %s93, 1
    %s95 = scalar_select %p92, %s93, %s94
    %p98 = pneg %p92
    %p99 = scmp.eq.s32.totalorder %s19, 3
    %p100 = por %p98, %p99
    %p101 = scmp.ne.s32.totalorder %s93, %s96
    %p102 = scmp.eq.s32.totalorder %s19, 0
    %p103 = por %p101, %p102
    %p104 = scmp.ne.s32.totalorder %s93, %s96
    %p105 = scmp.eq.s32.totalorder %s24, 3
    %p106 = por %p104, %p105
    %p107 = scmp.ne.s32.totalorder %s96, %s97
    %p108 = scmp.eq.s32.totalorder %s24, 0
    %p109 = por %p107, %p108
    %p110 = scmp.ne.s32.totalorder %s96, %s97
    %p111 = scmp.eq.s32.totalorder %s25, 3
    %p112 = por %p110, %p111
    %p114 = scmp.ne.s32.totalorder %s97, %s113
    %p115 = scmp.eq.s32.totalorder %s25, 0
    %p116 = por %p114, %p115
    %s117 = ssub.s32 %s27, %s34
    %p118 = scmp.eq.s32.totalorder %s117, 0
    %s120 = sadd.s32 %s119, 1
    %s121 = scalar_select %p118, %s119, %s120
    %p124 = pneg %p118
    %p125 = scmp.eq.s32.totalorder %s19, 3
    %p126 = por %p124, %p125
    %p127 = scmp.ne.s32.totalorder %s119, %s122
    %p128 = scmp.eq.s32.totalorder %s19, 0
    %p129 = por %p127, %p128
    %p130 = scmp.ne.s32.totalorder %s119, %s122
    %p131 = scmp.eq.s32.totalorder %s24, 3
    %p132 = por %p130, %p131
    %p133 = scmp.ne.s32.totalorder %s122, %s123
    %p134 = scmp.eq.s32.totalorder %s24, 0
    %p135 = por %p133, %p134
    %p136 = scmp.ne.s32.totalorder %s122, %s123
    %p137 = scmp.eq.s32.totalorder %s25, 3
    %p138 = por %p136, %p137
    %p140 = scmp.ne.s32.totalorder %s123, %s139
    %p141 = scmp.eq.s32.totalorder %s25, 0
    %p142 = por %p140, %p141
    %s143 = ssub.s32 %s27, %s34
    %p144 = scmp.eq.s32.totalorder %s143, 0
    %s146 = sadd.s32 %s145, 1
    %s147 = scalar_select %p144, %s145, %s146
    %p150 = pneg %p144
    %p151 = scmp.eq.s32.totalorder %s19, 3
    %p152 = por %p150, %p151
    %p153 = scmp.ne.s32.totalorder %s145, %s148
    %p154 = scmp.eq.s32.totalorder %s19, 0
    %p155 = por %p153, %p154
    %p156 = scmp.ne.s32.totalorder %s145, %s148
    %p157 = scmp.eq.s32.totalorder %s24, 3
    %p158 = por %p156, %p157
    %p159 = scmp.ne.s32.totalorder %s148, %s149
    %p160 = scmp.eq.s32.totalorder %s24, 0
    %p161 = por %p159, %p160
    %p162 = scmp.ne.s32.totalorder %s148, %s149
    %p163 = scmp.eq.s32.totalorder %s25, 3
    %p164 = por %p162, %p163
    %p166 = scmp.ne.s32.totalorder %s149, %s165
    %p167 = scmp.eq.s32.totalorder %s25, 0
    %p168 = por %p166, %p167
    %s169 = ssub.s32 %s27, %s34
    %p170 = scmp.eq.s32.totalorder %s169, 0
    %s172 = sadd.s32 %s171, 1
    %s173 = scalar_select %p170, %s171, %s172
    %p176 = pneg %p170
    %p177 = scmp.eq.s32.totalorder %s19, 3
    %p178 = por %p176, %p177
    %p179 = scmp.ne.s32.totalorder %s171, %s174
    %p180 = scmp.eq.s32.totalorder %s19, 0
    %p181 = por %p179, %p180
    %p182 = scmp.ne.s32.totalorder %s171, %s174
    %p183 = scmp.eq.s32.totalorder %s24, 3
    %p184 = por %p182, %p183
    %p185 = scmp.ne.s32.totalorder %s174, %s175
    %p186 = scmp.eq.s32.totalorder %s24, 0
    %p187 = por %p185, %p186
    %p188 = scmp.ne.s32.totalorder %s174, %s175
    %p189 = scmp.eq.s32.totalorder %s25, 3
    %p190 = por %p188, %p189
    %p192 = scmp.ne.s32.totalorder %s175, %s191
    %p193 = scmp.eq.s32.totalorder %s25, 0
    %p194 = por %p192, %p193
    %s195 = ssub.s32 %s27, %s34
    %p196 = scmp.eq.s32.totalorder %s195, 0
    %s198 = sadd.s32 %s197, 1
    %s199 = scalar_select %p196, %s197, %s198
    %p202 = pneg %p196
    %p203 = scmp.eq.s32.totalorder %s19, 3
    %p204 = por %p202, %p203
    %p205 = scmp.ne.s32.totalorder %s197, %s200
    %p206 = scmp.eq.s32.totalorder %s19, 0
    %p207 = por %p205, %p206
    %p208 = scmp.ne.s32.totalorder %s197, %s200
    %p209 = scmp.eq.s32.totalorder %s24, 3
    %p210 = por %p208, %p209
    %p211 = scmp.ne.s32.totalorder %s200, %s201
    %p212 = scmp.eq.s32.totalorder %s24, 0
    %p213 = por %p211, %p212
    %p214 = scmp.ne.s32.totalorder %s200, %s201
    %p215 = scmp.eq.s32.totalorder %s25, 3
    %p216 = por %p214, %p215
    %p218 = scmp.ne.s32.totalorder %s201, %s217
    %p219 = scmp.eq.s32.totalorder %s25, 0
    %p220 = por %p218, %p219
    %s221 = ssub.s32 %s27, %s34
    %p222 = scmp.eq.s32.totalorder %s221, 0
    %s224 = sadd.s32 %s223, 1
    %s225 = scalar_select %p222, %s223, %s224
    %p228 = pneg %p222
    %p229 = scmp.eq.s32.totalorder %s19, 3
    %p230 = por %p228, %p229
    %p231 = scmp.ne.s32.totalorder %s223, %s226
    %p232 = scmp.eq.s32.totalorder %s19, 0
    %p233 = por %p231, %p232
    %p234 = scmp.ne.s32.totalorder %s223, %s226
    %p235 = scmp.eq.s32.totalorder %s24, 3
    %p236 = por %p234, %p235
    %p237 = scmp.ne.s32.totalorder %s226, %s227
    %p238 = scmp.eq.s32.totalorder %s24, 0
    %p239 = por %p237, %p238
    %p240 = scmp.ne.s32.totalorder %s226, %s227
    %p241 = scmp.eq.s32.totalorder %s25, 3
    %p242 = por %p240, %p241
    %p244 = scmp.ne.s32.totalorder %s227, %s243
    %p245 = scmp.eq.s32.totalorder %s25, 0
    %p246 = por %p244, %p245
    %s247 = ssub.s32 %s27, %s34
    %p248 = scmp.eq.s32.totalorder %s247, 0
    %s250 = sadd.s32 %s249, 1
    %s251 = scalar_select %p248, %s249, %s250
    %p254 = pneg %p248
    %p255 = scmp.eq.s32.totalorder %s19, 3
    %p256 = por %p254, %p255
    %p257 = scmp.ne.s32.totalorder %s249, %s252
    %p258 = scmp.eq.s32.totalorder %s19, 0
    %p259 = por %p257, %p258
    %p260 = scmp.ne.s32.totalorder %s249, %s252
    %p261 = scmp.eq.s32.totalorder %s24, 3
    %p262 = por %p260, %p261
    %p263 = scmp.ne.s32.totalorder %s252, %s253
    %p264 = scmp.eq.s32.totalorder %s24, 0
    %p265 = por %p263, %p264
    %p266 = scmp.ne.s32.totalorder %s252, %s253
    %p267 = scmp.eq.s32.totalorder %s25, 3
    %p268 = por %p266, %p267
    %p270 = scmp.ne.s32.totalorder %s253, %s269
    %p271 = scmp.eq.s32.totalorder %s25, 0
    %p272 = por %p270, %p271
    %s273 = ssub.s32 %s27, %s34
    %p274 = scmp.eq.s32.totalorder %s273, 0
    %s276 = sadd.s32 %s275, 1
    %s277 = scalar_select %p274, %s275, %s276
    %p280 = pneg %p274
    %p281 = scmp.eq.s32.totalorder %s19, 3
    %p282 = por %p280, %p281
    %p283 = scmp.ne.s32.totalorder %s275, %s278
    %p284 = scmp.eq.s32.totalorder %s19, 0
    %p285 = por %p283, %p284
    %p286 = scmp.ne.s32.totalorder %s275, %s278
    %p287 = scmp.eq.s32.totalorder %s24, 3
    %p288 = por %p286, %p287
    %p289 = scmp.ne.s32.totalorder %s278, %s279
    %p290 = scmp.eq.s32.totalorder %s24, 0
    %p291 = por %p289, %p290
    %p292 = scmp.ne.s32.totalorder %s278, %s279
    %p293 = scmp.eq.s32.totalorder %s25, 3
    %p294 = por %p292, %p293
    %p296 = scmp.ne.s32.totalorder %s279, %s295
    %p297 = scmp.eq.s32.totalorder %s25, 0
    %p298 = por %p296, %p297
    %s299 = ssub.s32 %s27, %s34
    %p300 = scmp.eq.s32.totalorder %s299, 0
    %s302 = sadd.s32 %s301, 1
    %s303 = scalar_select %p300, %s301, %s302
    %p306 = pneg %p300
    %p307 = scmp.eq.s32.totalorder %s19, 3
    %p308 = por %p306, %p307
    %p309 = scmp.ne.s32.totalorder %s301, %s304
    %p310 = scmp.eq.s32.totalorder %s19, 0
    %p311 = por %p309, %p310
    %p312 = scmp.ne.s32.totalorder %s301, %s304
    %p313 = scmp.eq.s32.totalorder %s24, 3
    %p314 = por %p312, %p313
    %p315 = scmp.ne.s32.totalorder %s304, %s305
    %p316 = scmp.eq.s32.totalorder %s24, 0
    %p317 = por %p315, %p316
    %p318 = scmp.ne.s32.totalorder %s304, %s305
    %p319 = scmp.eq.s32.totalorder %s25, 3
    %p320 = por %p318, %p319
    %p322 = scmp.ne.s32.totalorder %s305, %s321
    %p323 = scmp.eq.s32.totalorder %s25, 0
    %p324 = por %p322, %p323
    %s325 = ssub.s32 %s27, %s34
    %p326 = scmp.eq.s32.totalorder %s325, 0
    %s328 = sadd.s32 %s327, 1
    %s329 = scalar_select %p326, %s327, %s328
    %p332 = pneg %p326
    %p333 = scmp.eq.s32.totalorder %s19, 3
    %p334 = por %p332, %p333
    %p335 = scmp.ne.s32.totalorder %s327, %s330
    %p336 = scmp.eq.s32.totalorder %s19, 0
    %p337 = por %p335, %p336
    %p338 = scmp.ne.s32.totalorder %s327, %s330
    %p339 = scmp.eq.s32.totalorder %s24, 3
    %p340 = por %p338, %p339
    %p341 = scmp.ne.s32.totalorder %s330, %s331
    %p342 = scmp.eq.s32.totalorder %s24, 0
    %p343 = por %p341, %p342
    %p344 = scmp.ne.s32.totalorder %s330, %s331
    %p345 = scmp.eq.s32.totalorder %s25, 3
    %p346 = por %p344, %p345
    %p348 = scmp.ne.s32.totalorder %s331, %s347
    %p349 = scmp.eq.s32.totalorder %s25, 0
    %p350 = por %p348, %p349
    %s351 = ssub.s32 %s27, %s34
    %p352 = scmp.eq.s32.totalorder %s351, 0
    %s354 = sadd.s32 %s353, 1
    %s355 = scalar_select %p352, %s353, %s354
    %p358 = pneg %p352
    %p359 = scmp.eq.s32.totalorder %s19, 3
    %p360 = por %p358, %p359
    %p361 = scmp.ne.s32.totalorder %s353, %s356
    %p362 = scmp.eq.s32.totalorder %s19, 0
    %p363 = por %p361, %p362
    %p364 = scmp.ne.s32.totalorder %s353, %s356
    %p365 = scmp.eq.s32.totalorder %s24, 3
    %p366 = por %p364, %p365
    %p367 = scmp.ne.s32.totalorder %s356, %s357
    %p368 = scmp.eq.s32.totalorder %s24, 0
    %p369 = por %p367, %p368
    %p370 = scmp.ne.s32.totalorder %s356, %s357
    %p371 = scmp.eq.s32.totalorder %s25, 3
    %p372 = por %p370, %p371
    %p374 = scmp.ne.s32.totalorder %s357, %s373
    %p375 = scmp.eq.s32.totalorder %s25, 0
    %p376 = por %p374, %p375
    %s377 = ssub.s32 %s26, %s38
    %p378 = scmp.eq.s32.totalorder %s377, 0
    %s380 = sadd.s32 %s379, 1
    %s381 = scalar_select %p378, %s379, %s380
    %p384 = pneg %p378
    %p385 = scmp.eq.s32.totalorder %s19, 3
    %p386 = por %p384, %p385
    %p387 = scmp.ne.s32.totalorder %s379, %s382
    %p388 = scmp.eq.s32.totalorder %s19, 0
    %p389 = por %p387, %p388
    %p390 = scmp.ne.s32.totalorder %s379, %s382
    %p391 = scmp.eq.s32.totalorder %s24, 3
    %p392 = por %p390, %p391
    %p393 = scmp.ne.s32.totalorder %s382, %s383
    %p394 = scmp.eq.s32.totalorder %s24, 0
    %p395 = por %p393, %p394
    %p396 = scmp.ne.s32.totalorder %s382, %s383
    %p397 = scmp.eq.s32.totalorder %s25, 3
    %p398 = por %p396, %p397
    %p400 = scmp.ne.s32.totalorder %s383, %s399
    %p401 = scmp.eq.s32.totalorder %s25, 0
    %p402 = por %p400, %p401
    %p403 = scmp.le.s32.totalorder 1, %s19
    %p404 = scmp.lt.s32.totalorder %s19, 5
    %p405 = pnand %p403, %p404
    %p406 = pneg %p405
    // Predicated region
    $region9: #{my_gpt2_forward.2} parent=5 // pred_check
      _
    $region10: #{my_gpt2_forward.2} parent=5 // pred_check_branch
      %408 = sbr.rel (%p405) target = $region12
    $region11: #{my_gpt2_forward.2} parent=5 // pred_region
      %s409 = ssub.s32 %s19, 1
    $region12: #{my_gpt2_forward.2} parent=5 // pred_fallthru
      _
    %p410 = scmp.lt.s32.totalorder %s19, 4
    // Predicated region
    $region13: #{my_gpt2_forward.2} parent=5 // pred_check
      %p411 = pneg %p410
    $region14: #{my_gpt2_forward.2} parent=5 // pred_check_branch
      %413 = sbr.rel (%p411) target = $region16
    $region15: #{my_gpt2_forward.2} parent=5 // pred_region
      // Predicated region
      $region17: #{my_gpt2_forward.2} parent=15 // pred_check
        %p414 = pneg %p51
      $region18: #{my_gpt2_forward.2} parent=15 // pred_check_branch
        %416 = sbr.rel (%p414) target = $region20
      $region19: #{my_gpt2_forward.2} parent=15 // pred_region
        %p417 = scmp.lt.s32.totalorder %s26, 1
        %s418 = scalar_select %p417, %s26, 1
        %s419 = smul.addr %s418, 8
        %s420 = scalar_lea.vmem %s0, %s419
      $region20: #{my_gpt2_forward.2} parent=15 // pred_fallthru
        _
      // Predicated region
      $region21: #{my_gpt2_forward.2} parent=15 // pred_check
        %p421 = pneg %p77
      $region22: #{my_gpt2_forward.2} parent=15 // pred_check_branch
        %423 = sbr.rel (%p421) target = $region24
      $region23: #{my_gpt2_forward.2} parent=15 // pred_region
        %p424 = scmp.lt.s32.totalorder %s27, 1
        %s425 = scalar_select %p424, %s27, 1
        %s426 = scalar_lea.vmem %s1, %s425
      $region24: #{my_gpt2_forward.2} parent=15 // pred_fallthru
        _
      // Predicated region
      $region25: #{my_gpt2_forward.2} parent=15 // pred_check
        %p427 = pneg %p103
      $region26: #{my_gpt2_forward.2} parent=15 // pred_check_branch
        %429 = sbr.rel (%p427) target = $region28
      $region27: #{my_gpt2_forward.2} parent=15 // pred_region
        %p430 = scmp.lt.s32.totalorder %s27, 1
        %s431 = scalar_select %p430, %s27, 1
        %s432 = scalar_lea.vmem %s2, %s431
      $region28: #{my_gpt2_forward.2} parent=15 // pred_fallthru
        _
      // Predicated region
      $region29: #{my_gpt2_forward.2} parent=15 // pred_check
        %p433 = pneg %p129
      $region30: #{my_gpt2_forward.2} parent=15 // pred_check_branch
        %435 = sbr.rel (%p433) target = $region32
      $region31: #{my_gpt2_forward.2} parent=15 // pred_region
        %p436 = scmp.lt.s32.totalorder %s27, 1
        %s437 = scalar_select %p436, %s27, 1
        %s438 = smul.addr %s437, 4
        %s439 = smul.addr %s438, 4
        %s440 = scalar_lea.vmem %s3, %s439
      $region32: #{my_gpt2_forward.2} parent=15 // pred_fallthru
        _
      // Predicated region
      $region33: #{my_gpt2_forward.2} parent=15 // pred_check
        %p441 = pneg %p155
      $region34: #{my_gpt2_forward.2} parent=15 // pred_check_branch
        %443 = sbr.rel (%p441) target = $region36
      $region35: #{my_gpt2_forward.2} parent=15 // pred_region
        %p444 = scmp.lt.s32.totalorder %s27, 1
        %s445 = scalar_select %p444, %s27, 1
        %s446 = scalar_lea.vmem %s4, %s445
      $region36: #{my_gpt2_forward.2} parent=15 // pred_fallthru
        _
      // Predicated region
      $region37: #{my_gpt2_forward.2} parent=15 // pred_check
        %p447 = pneg %p181
      $region38: #{my_gpt2_forward.2} parent=15 // pred_check_branch
        %449 = sbr.rel (%p447) target = $region40
      $region39: #{my_gpt2_forward.2} parent=15 // pred_region
        %p450 = scmp.lt.s32.totalorder %s27, 1
        %s451 = scalar_select %p450, %s27, 1
        %s452 = smul.addr %s451, 4
        %s453 = smul.addr %s452, 4
        %s454 = scalar_lea.vmem %s5, %s453
      $region40: #{my_gpt2_forward.2} parent=15 // pred_fallthru
        _
      // Predicated region
      $region41: #{my_gpt2_forward.2} parent=15 // pred_check
        %p455 = pneg %p207
      $region42: #{my_gpt2_forward.2} parent=15 // pred_check_branch
        %457 = sbr.rel (%p455) target = $region44
      $region43: #{my_gpt2_forward.2} parent=15 // pred_region
        %p458 = scmp.lt.s32.totalorder %s27, 1
        %s459 = scalar_select %p458, %s27, 1
        %s460 = scalar_lea.vmem %s6, %s459
      $region44: #{my_gpt2_forward.2} parent=15 // pred_fallthru
        _
      // Predicated region
      $region45: #{my_gpt2_forward.2} parent=15 // pred_check
        %p461 = pneg %p233
      $region46: #{my_gpt2_forward.2} parent=15 // pred_check_branch
        %463 = sbr.rel (%p461) target = $region48
      $region47: #{my_gpt2_forward.2} parent=15 // pred_region
        %p464 = scmp.lt.s32.totalorder %s27, 1
        %s465 = scalar_select %p464, %s27, 1
        %s466 = scalar_lea.vmem %s7, %s465
      $region48: #{my_gpt2_forward.2} parent=15 // pred_fallthru
        _
      // Predicated region
      $region49: #{my_gpt2_forward.2} parent=15 // pred_check
        %p467 = pneg %p259
      $region50: #{my_gpt2_forward.2} parent=15 // pred_check_branch
        %469 = sbr.rel (%p467) target = $region52
      $region51: #{my_gpt2_forward.2} parent=15 // pred_region
        %p470 = scmp.lt.s32.totalorder %s27, 1
        %s471 = scalar_select %p470, %s27, 1
        %s472 = scalar_lea.vmem %s8, %s471
      $region52: #{my_gpt2_forward.2} parent=15 // pred_fallthru
        _
      // Predicated region
      $region53: #{my_gpt2_forward.2} parent=15 // pred_check
        %p473 = pneg %p285
      $region54: #{my_gpt2_forward.2} parent=15 // pred_check_branch
        %475 = sbr.rel (%p473) target = $region56
      $region55: #{my_gpt2_forward.2} parent=15 // pred_region
        %p476 = scmp.lt.s32.totalorder %s27, 1
        %s477 = scalar_select %p476, %s27, 1
        %s478 = smul.addr %s477, 4
        %s479 = smul.addr %s478, 4
        %s480 = scalar_lea.vmem %s9, %s479
      $region56: #{my_gpt2_forward.2} parent=15 // pred_fallthru
        _
      // Predicated region
      $region57: #{my_gpt2_forward.2} parent=15 // pred_check
        %p481 = pneg %p311
      $region58: #{my_gpt2_forward.2} parent=15 // pred_check_branch
        %483 = sbr.rel (%p481) target = $region60
      $region59: #{my_gpt2_forward.2} parent=15 // pred_region
        %p484 = scmp.lt.s32.totalorder %s27, 1
        %s485 = scalar_select %p484, %s27, 1
        %s486 = scalar_lea.vmem %s10, %s485
      $region60: #{my_gpt2_forward.2} parent=15 // pred_fallthru
        _
      // Predicated region
      $region61: #{my_gpt2_forward.2} parent=15 // pred_check
        %p487 = pneg %p337
      $region62: #{my_gpt2_forward.2} parent=15 // pred_check_branch
        %489 = sbr.rel (%p487) target = $region64
      $region63: #{my_gpt2_forward.2} parent=15 // pred_region
        %p490 = scmp.lt.s32.totalorder %s27, 1
        %s491 = scalar_select %p490, %s27, 1
        %s492 = smul.addr %s491, 16
        %s493 = smul.addr %s492, 4
        %s494 = scalar_lea.vmem %s11, %s493
      $region64: #{my_gpt2_forward.2} parent=15 // pred_fallthru
        _
      // Predicated region
      $region65: #{my_gpt2_forward.2} parent=15 // pred_check
        %p495 = pneg %p363
      $region66: #{my_gpt2_forward.2} parent=15 // pred_check_branch
        %497 = sbr.rel (%p495) target = $region68
      $region67: #{my_gpt2_forward.2} parent=15 // pred_region
        %p498 = scmp.lt.s32.totalorder %s27, 1
        %s499 = scalar_select %p498, %s27, 1
        %s500 = scalar_lea.vmem %s12, %s499
      $region68: #{my_gpt2_forward.2} parent=15 // pred_fallthru
        _
    $region16: #{my_gpt2_forward.2} parent=5 // pred_fallthru
      _
    %p501 = scmp.le.s32.totalorder 1, %s19
    %p502 = scmp.lt.s32.totalorder %s19, 5
    %p503 = pnand %p501, %p502
    %p504 = pneg %p503
    // Predicated region
    $region69: #{my_gpt2_forward.2} parent=5 // pred_check
      _
    $region70: #{my_gpt2_forward.2} parent=5 // pred_check_branch
      %506 = sbr.rel (%p503) target = $region72
    $region71: #{my_gpt2_forward.2} parent=5 // pred_region
      %s507 = ssub.s32 %s19, 1
      %p508 = scmp.lt.s32.totalorder %s28, 1
      %s509 = scalar_select %p508, %s28, 1
      %s510 = smul.addr %s509, 8
      %s511 = scalar_lea.vmem %s0, %s510
      %p512 = pneg %p57
      %p513 = pneg %p54
      %p514 = scmp.lt.s32.totalorder %s29, 1
      %s515 = scalar_select %p514, %s29, 1
      %s516 = scalar_lea.vmem %s1, %s515
      %p517 = pneg %p83
      %p518 = pneg %p80
      %p519 = scmp.lt.s32.totalorder %s29, 1
      %s520 = scalar_select %p519, %s29, 1
      %s521 = scalar_lea.vmem %s2, %s520
      %p522 = pneg %p109
      %p523 = pneg %p106
      %p524 = scmp.lt.s32.totalorder %s29, 1
      %s525 = scalar_select %p524, %s29, 1
      %s526 = smul.addr %s525, 4
      %s527 = smul.addr %s526, 4
      %s528 = scalar_lea.vmem %s3, %s527
      %p529 = pneg %p135
      %p530 = pneg %p132
      %p531 = scmp.lt.s32.totalorder %s29, 1
      %s532 = scalar_select %p531, %s29, 1
      %s533 = scalar_lea.vmem %s4, %s532
      %p534 = pneg %p161
      %p535 = pneg %p158
      %p536 = scmp.lt.s32.totalorder %s29, 1
      %s537 = scalar_select %p536, %s29, 1
      %s538 = smul.addr %s537, 4
      %s539 = smul.addr %s538, 4
      %s540 = scalar_lea.vmem %s5, %s539
      %p541 = pneg %p187
      %p542 = pneg %p184
      %p543 = scmp.lt.s32.totalorder %s29, 1
      %s544 = scalar_select %p543, %s29, 1
      %s545 = scalar_lea.vmem %s6, %s544
      %p546 = pneg %p213
      %p547 = pneg %p210
      %p548 = scmp.lt.s32.totalorder %s29, 1
      %s549 = scalar_select %p548, %s29, 1
      %s550 = scalar_lea.vmem %s7, %s549
      %p551 = pneg %p239
      %p552 = pneg %p236
      %p553 = scmp.lt.s32.totalorder %s29, 1
      %s554 = scalar_select %p553, %s29, 1
      %s555 = scalar_lea.vmem %s8, %s554
      %p556 = pneg %p265
      %p557 = pneg %p262
      %p558 = scmp.lt.s32.totalorder %s29, 1
      %s559 = scalar_select %p558, %s29, 1
      %s560 = smul.addr %s559, 4
      %s561 = smul.addr %s560, 4
      %s562 = scalar_lea.vmem %s9, %s561
      %p563 = pneg %p291
      %p564 = pneg %p288
      %p565 = scmp.lt.s32.totalorder %s29, 1
      %s566 = scalar_select %p565, %s29, 1
      %s567 = scalar_lea.vmem %s10, %s566
      %p568 = pneg %p317
      %p569 = pneg %p314
      %p570 = scmp.lt.s32.totalorder %s29, 1
      %s571 = scalar_select %p570, %s29, 1
      %s572 = smul.addr %s571, 16
      %s573 = smul.addr %s572, 4
      %s574 = scalar_lea.vmem %s11, %s573
      %p575 = pneg %p343
      %p576 = pneg %p340
      %p577 = scmp.lt.s32.totalorder %s29, 1
      %s578 = scalar_select %p577, %s29, 1
      %s579 = scalar_lea.vmem %s12, %s578
      %p580 = pneg %p369
      %p581 = pneg %p366
      %p582 = pneg %p395
      %p583 = pneg %p392
      %p584 = scmp.lt.s32.totalorder %s28, 1
      %s585 = scalar_select %p584, %s28, 1
      %s586 = smul.addr %s585, 8
      %s587 = scalar_lea.vmem %s13, %s586
      %p588 = scmp.lt.s32.totalorder %s28, 1
      %s589 = scalar_select %p588, %s28, 1
      %s590 = smul.addr %s589, 8
      %s591 = scalar_lea.vmem %s0, %s590
      %p592 = scmp.lt.s32.totalorder %s29, 1
      %s593 = scalar_select %p592, %s29, 1
      %s594 = scalar_lea.vmem %s1, %s593
      %p595 = scmp.lt.s32.totalorder %s29, 1
      %s596 = scalar_select %p595, %s29, 1
      %s597 = scalar_lea.vmem %s2, %s596
      %p598 = scmp.lt.s32.totalorder %s29, 1
      %s599 = scalar_select %p598, %s29, 1
      %s600 = smul.addr %s599, 4
      %s601 = smul.addr %s600, 4
      %s602 = scalar_lea.vmem %s3, %s601
      %p603 = scmp.lt.s32.totalorder %s29, 1
      %s604 = scalar_select %p603, %s29, 1
      %s605 = scalar_lea.vmem %s4, %s604
      %p606 = scmp.lt.s32.totalorder %s29, 1
      %s607 = scalar_select %p606, %s29, 1
      %s608 = smul.addr %s607, 4
      %s609 = smul.addr %s608, 4
      %s610 = scalar_lea.vmem %s5, %s609
      %p611 = scmp.lt.s32.totalorder %s29, 1
      %s612 = scalar_select %p611, %s29, 1
      %s613 = scalar_lea.vmem %s6, %s612
      %p614 = scmp.lt.s32.totalorder %s29, 1
      %s615 = scalar_select %p614, %s29, 1
      %s616 = scalar_lea.vmem %s7, %s615
      %p617 = scmp.lt.s32.totalorder %s29, 1
      %s618 = scalar_select %p617, %s29, 1
      %s619 = scalar_lea.vmem %s8, %s618
      %p620 = scmp.lt.s32.totalorder %s29, 1
      %s621 = scalar_select %p620, %s29, 1
      %s622 = smul.addr %s621, 4
      %s623 = smul.addr %s622, 4
      %s624 = scalar_lea.vmem %s9, %s623
      %p625 = scmp.lt.s32.totalorder %s29, 1
      %s626 = scalar_select %p625, %s29, 1
      %s627 = scalar_lea.vmem %s10, %s626
      %p628 = scmp.lt.s32.totalorder %s29, 1
      %s629 = scalar_select %p628, %s29, 1
      %s630 = smul.addr %s629, 16
      %s631 = smul.addr %s630, 4
      %s632 = scalar_lea.vmem %s11, %s631
      %p633 = scmp.lt.s32.totalorder %s29, 1
      %s634 = scalar_select %p633, %s29, 1
      %s635 = scalar_lea.vmem %s12, %s634
      %p636 = scmp.lt.s32.totalorder %s28, 1
      %s637 = scalar_select %p636, %s28, 1
      %s638 = smul.addr %s637, 8
      %s639 = scalar_lea.vmem %s13, %s638
      %p641 = scmp.eq.s32.totalorder %s29, 0
      // Predicated region
      $region73: #{my_gpt2_forward.2} parent=71 // pred_check
        %p642 = pneg %p641
      $region74: #{my_gpt2_forward.2} parent=71 // pred_check_branch
        %644 = sbr.rel (%p642) target = $region76
      $region75: #{my_gpt2_forward.2} parent=71 // pred_region
        %v645 = vld [vmem:[%s591] sm:$0xff]
        %vm646 = vcmask 261120
        %647 = vst.msk [vmem:[%s639] sm:$0xff] %vm646, %v645
      $region76: #{my_gpt2_forward.2} parent=71 // pred_fallthru
        _
      %v648 = vld [vmem:[%s639] sm:$0xff]
      %v649 = vld [vmem:[%s594] sm:$0x1]
      %v650 = vld [vmem:[%s597] sm:$0x1]
      %vm651 = vcmask 261120
      %v652 = vsel %vm651, %v648, 0.0
      %653 = vadd.xlane.f32.xlu0 %v652
      %v654 = vpop.xlane.xlu0 %653
      %v655 = vrcp.pop 32.0
      %v656 = vmul.f32 %v654, %v655
      %v657 = vsub.f32 %v648, %v656
      %v658 = vmul.f32 %v657, %v657
      %v659 = vsel %vm651, %v658, 0.0
      %660 = vadd.xlane.f32.xlu0 %v659
      %v661 = vpop.xlane.xlu0 %660
      %v662 = vmul.f32 %v661, %v655
      %v663 = vadd.f32 %v662, 1e-05
      %v664 = vrsqrt.pop %v663
      %v665 = vmul.f32 %v657, %v664
      %v667 = vlaneseq
      %v668 = vshrl.u32 %v667, 7
      %v669 = vsub.s32 0, %v668
      %v670 = vrot.slane %v649, %v669
      %v672 = vmul.f32 %v665, %v670
      %v674 = vlaneseq
      %v675 = vshrl.u32 %v674, 7
      %v676 = vsub.s32 0, %v675
      %v677 = vrot.slane %v650, %v676
      %v679 = vadd.f32 %v672, %v677
      %v680 = vpack.c.bf16 %v679, %v679
      %v681 = vld [vmem:[%s602] sm:$0xf]
      %v682 = vld [vmem:[%s602 + $0x4] sm:$0xf]
      %v683 = vld [vmem:[%s602 + $0x8] sm:$0xf]
      %v684 = vld [vmem:[%s602 + $0xc] sm:$0xf]
      %v685 = vld [vmem:[%s605] sm:$0x1]
      %v687 = vlaneseq
      %v688 = vshrl.u32 %v687, 7
      %v689 = vsub.s32 0, %v688
      %v690 = vrot.slane %v685, %v689
      %v696 = vunpack.c.l.b16 %v681
      %v697 = vunpack.c.l.b16 %v682
      %v698 = vunpack.c.l.b16 %v683
      %v699 = vunpack.c.l.b16 %v684
      %v700 = vpack.c.b16 %v697, %v696
      %v701 = vpack.c.b16 %v699, %v698
      %v705 = vsel %vm651, %v680, 0
      %707 = vmatprep.subr.bf16.mxu0 0
      %708 = vmatpush1.bf16.msra.mxu0 0
      %709 = vmatprep.subr.bf16.mxu0 0
      %710 = vmatpush1.bf16.msra.mxu0 0
      %711 = vmatprep.subr.bf16.mxu0 0
      %712 = vmatpush1.bf16.msra.mxu0 0
      %713 = vmatprep.subr.bf16.mxu0 0
      %714 = vmatpush1.bf16.msra.mxu0 0
      %715 = vmatprep.subr.bf16.mxu0 0
      %716 = vmatpush1.bf16.msra.mxu0 0
      %717 = vmatprep.subr.bf16.mxu0 0
      %718 = vmatpush1.bf16.msra.mxu0 0
      %719 = vmatprep.subr.bf16.mxu0 0
      %720 = vmatpush1.bf16.msra.mxu0 %v701
      %721 = vmatprep.subr.bf16.mxu0 0
      %722 = vmatpush1.bf16.msra.mxu0 %v700
      %723 = vmatprep.subr.bf16.mxu0 0
      %724 = vmatpush2.bf16.msra.mxu0 0
      %725 = vmatprep.subr.bf16.mxu0 0
      %726 = vmatpush2.bf16.msra.mxu0 0
      %727 = vmatprep.subr.bf16.mxu0 0
      %728 = vmatpush2.bf16.msra.mxu0 0
      %729 = vmatprep.subr.bf16.mxu0 0
      %730 = vmatpush2.bf16.msra.mxu0 0
      %731 = vmatprep.subr.bf16.mxu0 0
      %732 = vmatpush2.bf16.msra.mxu0 0
      %733 = vmatprep.subr.bf16.mxu0 0
      %734 = vmatpush2.bf16.msra.mxu0 0
      %735 = vmatprep.subr.bf16.mxu0 0
      %736 = vmatpush2.bf16.msra.mxu0 0
      %737 = vmatprep.subr.bf16.mxu0 0
      %738 = vmatpush2.bf16.msra.mxu0 0
      %739 = vmatprep.mubr.bf16.mxu0 0
      %740 = vmatmul.mubr.bf16.gmra.mxu0 %v705
      %v741 = vpop.f32.mrf.mxu0
      %v742 = vadd.f32 %v690, %v741
      %v743 = vpop.f32.mrf.mxu0
      %v744 = vpop.f32.mrf.mxu0
      %v745 = vpop.f32.mrf.mxu0
      %746 = vdwg.mxu0
      %v747 = vmul.f32 %v742, 0.35355338
      %749 = vrot.lane.b32.xlu0 %v747, 120
      %v750 = vpop.permute.xlu0 %749
      %752 = vrot.lane.b32.xlu0 %v747, 112
      %v753 = vpop.permute.xlu0 %752
      %755 = vrot.lane.b32.xlu0 %v747, 104
      %v756 = vpop.permute.xlu0 %755
      %v758 = vcombine.low %v747, %v753
      %v759 = vcombine.high %v747, %v753
      %v761 = vunpack.c.l.s4 1983009808
      %v762 = vunpack.c.0.s8 %v761
      %v763 = vlaneseq
      %v764 = vshrl.u32 %v763, 7
      %v765 = vsub.s32 %v762, %v764
      %v766 = vrot.slane %v758, %v765
      %v768 = vunpack.c.l.s4 1983009808
      %v769 = vunpack.c.0.s8 %v768
      %v770 = vlaneseq
      %v771 = vshrl.u32 %v770, 7
      %v772 = vsub.s32 %v769, %v771
      %v773 = vrot.slane %v759, %v772
      %v774 = vcombine.low %v750, %v756
      %v775 = vcombine.high %v750, %v756
      %v777 = vunpack.c.l.s4 1983009808
      %v778 = vunpack.c.0.s8 %v777
      %v779 = vlaneseq
      %v780 = vshrl.u32 %v779, 7
      %v781 = vsub.s32 %v778, %v780
      %v782 = vrot.slane %v774, %v781
      %v784 = vunpack.c.l.s4 1983009808
      %v785 = vunpack.c.0.s8 %v784
      %v786 = vlaneseq
      %v787 = vshrl.u32 %v786, 7
      %v788 = vsub.s32 %v785, %v787
      %v789 = vrot.slane %v775, %v788
      %v790 = vcombine.low %v766, %v782
      %v791 = vcombine.high %v766, %v782
      %v793 = vunpack.c.l.s4 1934713408
      %v794 = vunpack.c.0.s8 %v793
      %v795 = vlaneseq
      %v796 = vshrl.u32 %v795, 7
      %v797 = vsub.s32 %v794, %v796
      %v798 = vrot.slane %v790, %v797
      %v800 = vunpack.c.l.s4 1934713408
      %v801 = vunpack.c.0.s8 %v800
      %v802 = vlaneseq
      %v803 = vshrl.u32 %v802, 7
      %v804 = vsub.s32 %v801, %v803
      %v805 = vrot.slane %v791, %v804
      %v806 = vcombine.low %v773, %v789
      %v807 = vcombine.high %v773, %v789
      %v809 = vunpack.c.l.s4 1934713408
      %v810 = vunpack.c.0.s8 %v809
      %v811 = vlaneseq
      %v812 = vshrl.u32 %v811, 7
      %v813 = vsub.s32 %v810, %v812
      %v814 = vrot.slane %v806, %v813
      %v816 = vunpack.c.l.s4 1934713408
      %v817 = vunpack.c.0.s8 %v816
      %v818 = vlaneseq
      %v819 = vshrl.u32 %v818, 7
      %v820 = vsub.s32 %v817, %v819
      %v821 = vrot.slane %v807, %v820
      %v822 = vcombine.high %v798, 0.0
      %v823 = vcombine.high %v805, 0.0
      %v824 = vcombine.high %v814, 0.0
      %v825 = vcombine.high %v821, 0.0
      %827 = vrot.lane.b32.xlu0 %v742, 120
      %v828 = vpop.permute.xlu0 %827
      %829 = vrot.lane.b32.xlu0 %v742, 112
      %v830 = vpop.permute.xlu0 %829
      %831 = vrot.lane.b32.xlu0 %v742, 104
      %v832 = vpop.permute.xlu0 %831
      %833 = vrot.lane.b32.xlu0 %v742, 96
      %v834 = vpop.permute.xlu0 %833
      %835 = vrot.lane.b32.xlu0 %v828, 96
      %v836 = vpop.permute.xlu0 %835
      %837 = vrot.lane.b32.xlu0 %v830, 96
      %v838 = vpop.permute.xlu0 %837
      %839 = vrot.lane.b32.xlu0 %v832, 96
      %v840 = vpop.permute.xlu0 %839
      %v845 = vcombine.low %v834, %v838
      %v846 = vcombine.high %v834, %v838
      %v848 = vunpack.c.l.s4 1983009808
      %v849 = vunpack.c.0.s8 %v848
      %v850 = vlaneseq
      %v851 = vshrl.u32 %v850, 7
      %v852 = vsub.s32 %v849, %v851
      %v853 = vrot.slane %v845, %v852
      %v855 = vunpack.c.l.s4 1983009808
      %v856 = vunpack.c.0.s8 %v855
      %v857 = vlaneseq
      %v858 = vshrl.u32 %v857, 7
      %v859 = vsub.s32 %v856, %v858
      %v860 = vrot.slane %v846, %v859
      %v861 = vcombine.low %v836, %v840
      %v862 = vcombine.high %v836, %v840
      %v864 = vunpack.c.l.s4 1983009808
      %v865 = vunpack.c.0.s8 %v864
      %v866 = vlaneseq
      %v867 = vshrl.u32 %v866, 7
      %v868 = vsub.s32 %v865, %v867
      %v869 = vrot.slane %v861, %v868
      %v871 = vunpack.c.l.s4 1983009808
      %v872 = vunpack.c.0.s8 %v871
      %v873 = vlaneseq
      %v874 = vshrl.u32 %v873, 7
      %v875 = vsub.s32 %v872, %v874
      %v876 = vrot.slane %v862, %v875
      %v877 = vcombine.low %v853, %v869
      %v878 = vcombine.high %v853, %v869
      %v880 = vunpack.c.l.s4 1934713408
      %v881 = vunpack.c.0.s8 %v880
      %v882 = vlaneseq
      %v883 = vshrl.u32 %v882, 7
      %v884 = vsub.s32 %v881, %v883
      %v885 = vrot.slane %v877, %v884
      %v887 = vunpack.c.l.s4 1934713408
      %v888 = vunpack.c.0.s8 %v887
      %v889 = vlaneseq
      %v890 = vshrl.u32 %v889, 7
      %v891 = vsub.s32 %v888, %v890
      %v892 = vrot.slane %v878, %v891
      %v893 = vcombine.low %v860, %v876
      %v894 = vcombine.high %v860, %v876
      %v896 = vunpack.c.l.s4 1934713408
      %v897 = vunpack.c.0.s8 %v896
      %v898 = vlaneseq
      %v899 = vshrl.u32 %v898, 7
      %v900 = vsub.s32 %v897, %v899
      %v901 = vrot.slane %v893, %v900
      %v903 = vunpack.c.l.s4 1934713408
      %v904 = vunpack.c.0.s8 %v903
      %v905 = vlaneseq
      %v906 = vshrl.u32 %v905, 7
      %v907 = vsub.s32 %v904, %v906
      %v908 = vrot.slane %v894, %v907
      %v909 = vcombine.high %v885, 0.0
      %v910 = vcombine.high %v892, 0.0
      %v911 = vcombine.high %v901, 0.0
      %v912 = vcombine.high %v908, 0.0
      %913 = vrot.lane.b32.xlu0 %v742, 64
      %v914 = vpop.permute.xlu0 %913
      %915 = vrot.lane.b32.xlu0 %v828, 64
      %v916 = vpop.permute.xlu0 %915
      %917 = vrot.lane.b32.xlu0 %v830, 64
      %v918 = vpop.permute.xlu0 %917
      %919 = vrot.lane.b32.xlu0 %v832, 64
      %v920 = vpop.permute.xlu0 %919
      %v925 = vcombine.low %v914, %v918
      %v926 = vcombine.high %v914, %v918
      %v928 = vunpack.c.l.s4 1983009808
      %v929 = vunpack.c.0.s8 %v928
      %v930 = vlaneseq
      %v931 = vshrl.u32 %v930, 7
      %v932 = vsub.s32 %v929, %v931
      %v933 = vrot.slane %v925, %v932
      %v935 = vunpack.c.l.s4 1983009808
      %v936 = vunpack.c.0.s8 %v935
      %v937 = vlaneseq
      %v938 = vshrl.u32 %v937, 7
      %v939 = vsub.s32 %v936, %v938
      %v940 = vrot.slane %v926, %v939
      %v941 = vcombine.low %v916, %v920
      %v942 = vcombine.high %v916, %v920
      %v944 = vunpack.c.l.s4 1983009808
      %v945 = vunpack.c.0.s8 %v944
      %v946 = vlaneseq
      %v947 = vshrl.u32 %v946, 7
      %v948 = vsub.s32 %v945, %v947
      %v949 = vrot.slane %v941, %v948
      %v951 = vunpack.c.l.s4 1983009808
      %v952 = vunpack.c.0.s8 %v951
      %v953 = vlaneseq
      %v954 = vshrl.u32 %v953, 7
      %v955 = vsub.s32 %v952, %v954
      %v956 = vrot.slane %v942, %v955
      %v957 = vcombine.low %v933, %v949
      %v958 = vcombine.high %v933, %v949
      %v960 = vunpack.c.l.s4 1934713408
      %v961 = vunpack.c.0.s8 %v960
      %v962 = vlaneseq
      %v963 = vshrl.u32 %v962, 7
      %v964 = vsub.s32 %v961, %v963
      %v965 = vrot.slane %v957, %v964
      %v967 = vunpack.c.l.s4 1934713408
      %v968 = vunpack.c.0.s8 %v967
      %v969 = vlaneseq
      %v970 = vshrl.u32 %v969, 7
      %v971 = vsub.s32 %v968, %v970
      %v972 = vrot.slane %v958, %v971
      %v973 = vcombine.low %v940, %v956
      %v974 = vcombine.high %v940, %v956
      %v976 = vunpack.c.l.s4 1934713408
      %v977 = vunpack.c.0.s8 %v976
      %v978 = vlaneseq
      %v979 = vshrl.u32 %v978, 7
      %v980 = vsub.s32 %v977, %v979
      %v981 = vrot.slane %v973, %v980
      %v983 = vunpack.c.l.s4 1934713408
      %v984 = vunpack.c.0.s8 %v983
      %v985 = vlaneseq
      %v986 = vshrl.u32 %v985, 7
      %v987 = vsub.s32 %v984, %v986
      %v988 = vrot.slane %v974, %v987
      %v989 = vcombine.high %v965, 0.0
      %v990 = vcombine.high %v972, 0.0
      %v991 = vcombine.high %v981, 0.0
      %v992 = vcombine.high %v988, 0.0
      %v993 = vcombine.low %v798, %v805
      %v995 = vunpack.c.l.s4 1983009808
      %v996 = vunpack.c.0.s8 %v995
      %v997 = vlaneseq
      %v998 = vshrl.u32 %v997, 7
      %v999 = vsub.s32 %v996, %v998
      %v1000 = vrot.slane %v993, %v999
      %v1001 = vcombine.low %v822, %v823
      %v1003 = vunpack.c.l.s4 1983009808
      %v1004 = vunpack.c.0.s8 %v1003
      %v1005 = vlaneseq
      %v1006 = vshrl.u32 %v1005, 7
      %v1007 = vsub.s32 %v1004, %v1006
      %v1008 = vrot.slane %v1001, %v1007
      %v1009 = vcombine.low %v814, %v821
      %v1011 = vunpack.c.l.s4 1983009808
      %v1012 = vunpack.c.0.s8 %v1011
      %v1013 = vlaneseq
      %v1014 = vshrl.u32 %v1013, 7
      %v1015 = vsub.s32 %v1012, %v1014
      %v1016 = vrot.slane %v1009, %v1015
      %v1017 = vcombine.low %v824, %v825
      %v1019 = vunpack.c.l.s4 1983009808
      %v1020 = vunpack.c.0.s8 %v1019
      %v1021 = vlaneseq
      %v1022 = vshrl.u32 %v1021, 7
      %v1023 = vsub.s32 %v1020, %v1022
      %v1024 = vrot.slane %v1017, %v1023
      %v1025 = vcombine.low %v1000, %v1008
      %v1026 = vcombine.high %v1000, %v1008
      %v1028 = vunpack.c.l.s4 1934713408
      %v1029 = vunpack.c.0.s8 %v1028
      %v1030 = vlaneseq
      %v1031 = vshrl.u32 %v1030, 7
      %v1032 = vsub.s32 %v1029, %v1031
      %v1033 = vrot.slane %v1025, %v1032
      %v1035 = vunpack.c.l.s4 1934713408
      %v1036 = vunpack.c.0.s8 %v1035
      %v1037 = vlaneseq
      %v1038 = vshrl.u32 %v1037, 7
      %v1039 = vsub.s32 %v1036, %v1038
      %v1040 = vrot.slane %v1026, %v1039
      %v1041 = vcombine.low %v1016, %v1024
      %v1042 = vcombine.high %v1016, %v1024
      %v1044 = vunpack.c.l.s4 1934713408
      %v1045 = vunpack.c.0.s8 %v1044
      %v1046 = vlaneseq
      %v1047 = vshrl.u32 %v1046, 7
      %v1048 = vsub.s32 %v1045, %v1047
      %v1049 = vrot.slane %v1041, %v1048
      %v1051 = vunpack.c.l.s4 1934713408
      %v1052 = vunpack.c.0.s8 %v1051
      %v1053 = vlaneseq
      %v1054 = vshrl.u32 %v1053, 7
      %v1055 = vsub.s32 %v1052, %v1054
      %v1056 = vrot.slane %v1042, %v1055
      %v1057 = vcombine.low %v1033, %v1049
      %v1058 = vcombine.high %v1033, %v1049
      %v1059 = vcombine.low %v1040, %v1056
      %v1060 = vcombine.high %v1040, %v1056
      %v1061 = vpack.c.bf16 %v1057, %v1057
      %v1062 = vpack.c.bf16 %v1058, %v1058
      %v1063 = vpack.c.bf16 %v1059, %v1059
      %v1064 = vpack.c.bf16 %v1060, %v1060
      %v1065 = vcombine.low %v885, %v892
      %v1067 = vunpack.c.l.s4 1983009808
      %v1068 = vunpack.c.0.s8 %v1067
      %v1069 = vlaneseq
      %v1070 = vshrl.u32 %v1069, 7
      %v1071 = vsub.s32 %v1068, %v1070
      %v1072 = vrot.slane %v1065, %v1071
      %v1073 = vcombine.low %v909, %v910
      %v1075 = vunpack.c.l.s4 1983009808
      %v1076 = vunpack.c.0.s8 %v1075
      %v1077 = vlaneseq
      %v1078 = vshrl.u32 %v1077, 7
      %v1079 = vsub.s32 %v1076, %v1078
      %v1080 = vrot.slane %v1073, %v1079
      %v1081 = vcombine.low %v901, %v908
      %v1083 = vunpack.c.l.s4 1983009808
      %v1084 = vunpack.c.0.s8 %v1083
      %v1085 = vlaneseq
      %v1086 = vshrl.u32 %v1085, 7
      %v1087 = vsub.s32 %v1084, %v1086
      %v1088 = vrot.slane %v1081, %v1087
      %v1089 = vcombine.low %v911, %v912
      %v1091 = vunpack.c.l.s4 1983009808
      %v1092 = vunpack.c.0.s8 %v1091
      %v1093 = vlaneseq
      %v1094 = vshrl.u32 %v1093, 7
      %v1095 = vsub.s32 %v1092, %v1094
      %v1096 = vrot.slane %v1089, %v1095
      %v1097 = vcombine.low %v1072, %v1080
      %v1098 = vcombine.high %v1072, %v1080
      %v1100 = vunpack.c.l.s4 1934713408
      %v1101 = vunpack.c.0.s8 %v1100
      %v1102 = vlaneseq
      %v1103 = vshrl.u32 %v1102, 7
      %v1104 = vsub.s32 %v1101, %v1103
      %v1105 = vrot.slane %v1097, %v1104
      %v1107 = vunpack.c.l.s4 1934713408
      %v1108 = vunpack.c.0.s8 %v1107
      %v1109 = vlaneseq
      %v1110 = vshrl.u32 %v1109, 7
      %v1111 = vsub.s32 %v1108, %v1110
      %v1112 = vrot.slane %v1098, %v1111
      %v1113 = vcombine.low %v1088, %v1096
      %v1114 = vcombine.high %v1088, %v1096
      %v1116 = vunpack.c.l.s4 1934713408
      %v1117 = vunpack.c.0.s8 %v1116
      %v1118 = vlaneseq
      %v1119 = vshrl.u32 %v1118, 7
      %v1120 = vsub.s32 %v1117, %v1119
      %v1121 = vrot.slane %v1113, %v1120
      %v1123 = vunpack.c.l.s4 1934713408
      %v1124 = vunpack.c.0.s8 %v1123
      %v1125 = vlaneseq
      %v1126 = vshrl.u32 %v1125, 7
      %v1127 = vsub.s32 %v1124, %v1126
      %v1128 = vrot.slane %v1114, %v1127
      %v1129 = vcombine.low %v1105, %v1121
      %v1130 = vcombine.high %v1105, %v1121
      %v1131 = vcombine.low %v1112, %v1128
      %v1132 = vcombine.high %v1112, %v1128
      %v1133 = vpack.c.bf16 %v1129, %v1129
      %v1134 = vpack.c.bf16 %v1130, %v1130
      %v1135 = vpack.c.bf16 %v1131, %v1131
      %v1136 = vpack.c.bf16 %v1132, %v1132
      %v1137 = vcombine.low %v965, %v972
      %v1139 = vunpack.c.l.s4 1983009808
      %v1140 = vunpack.c.0.s8 %v1139
      %v1141 = vlaneseq
      %v1142 = vshrl.u32 %v1141, 7
      %v1143 = vsub.s32 %v1140, %v1142
      %v1144 = vrot.slane %v1137, %v1143
      %v1145 = vcombine.low %v989, %v990
      %v1147 = vunpack.c.l.s4 1983009808
      %v1148 = vunpack.c.0.s8 %v1147
      %v1149 = vlaneseq
      %v1150 = vshrl.u32 %v1149, 7
      %v1151 = vsub.s32 %v1148, %v1150
      %v1152 = vrot.slane %v1145, %v1151
      %v1153 = vcombine.low %v981, %v988
      %v1155 = vunpack.c.l.s4 1983009808
      %v1156 = vunpack.c.0.s8 %v1155
      %v1157 = vlaneseq
      %v1158 = vshrl.u32 %v1157, 7
      %v1159 = vsub.s32 %v1156, %v1158
      %v1160 = vrot.slane %v1153, %v1159
      %v1161 = vcombine.low %v991, %v992
      %v1163 = vunpack.c.l.s4 1983009808
      %v1164 = vunpack.c.0.s8 %v1163
      %v1165 = vlaneseq
      %v1166 = vshrl.u32 %v1165, 7
      %v1167 = vsub.s32 %v1164, %v1166
      %v1168 = vrot.slane %v1161, %v1167
      %v1169 = vcombine.low %v1144, %v1152
      %v1170 = vcombine.high %v1144, %v1152
      %v1172 = vunpack.c.l.s4 1934713408
      %v1173 = vunpack.c.0.s8 %v1172
      %v1174 = vlaneseq
      %v1175 = vshrl.u32 %v1174, 7
      %v1176 = vsub.s32 %v1173, %v1175
      %v1177 = vrot.slane %v1169, %v1176
      %v1179 = vunpack.c.l.s4 1934713408
      %v1180 = vunpack.c.0.s8 %v1179
      %v1181 = vlaneseq
      %v1182 = vshrl.u32 %v1181, 7
      %v1183 = vsub.s32 %v1180, %v1182
      %v1184 = vrot.slane %v1170, %v1183
      %v1185 = vcombine.low %v1160, %v1168
      %v1186 = vcombine.high %v1160, %v1168
      %v1188 = vunpack.c.l.s4 1934713408
      %v1189 = vunpack.c.0.s8 %v1188
      %v1190 = vlaneseq
      %v1191 = vshrl.u32 %v1190, 7
      %v1192 = vsub.s32 %v1189, %v1191
      %v1193 = vrot.slane %v1185, %v1192
      %v1195 = vunpack.c.l.s4 1934713408
      %v1196 = vunpack.c.0.s8 %v1195
      %v1197 = vlaneseq
      %v1198 = vshrl.u32 %v1197, 7
      %v1199 = vsub.s32 %v1196, %v1198
      %v1200 = vrot.slane %v1186, %v1199
      %v1201 = vcombine.low %v1177, %v1193
      %v1202 = vcombine.high %v1177, %v1193
      %v1203 = vcombine.low %v1184, %v1200
      %v1204 = vcombine.high %v1184, %v1200
      %v1205 = vpack.c.bf16 %v1201, %v1201
      %v1206 = vpack.c.bf16 %v1202, %v1202
      %v1207 = vpack.c.bf16 %v1203, %v1203
      %v1208 = vpack.c.bf16 %v1204, %v1204
      %vm1209 = vcmask 64512
      %v1211 = vsel %vm1209, %v1061, 0
      %v1214 = vsel %vm1209, %v1133, 0
      %1216 = vmatprep.subr.bf16.mxu0 0
      %1217 = vmatpush1.bf16.xpose.msra.mxu0 0
      %1218 = vmatprep.subr.bf16.mxu0 0
      %1219 = vmatpush1.bf16.xpose.msra.mxu0 0
      %1220 = vmatprep.subr.bf16.mxu0 0
      %1221 = vmatpush1.bf16.xpose.msra.mxu0 0
      %1222 = vmatprep.subr.bf16.mxu0 0
      %1223 = vmatpush1.bf16.xpose.msra.mxu0 0
      %1224 = vmatprep.subr.bf16.mxu0 0
      %1225 = vmatpush1.bf16.xpose.msra.mxu0 0
      %1226 = vmatprep.subr.bf16.mxu0 0
      %1227 = vmatpush1.bf16.xpose.msra.mxu0 0
      %1228 = vmatprep.subr.bf16.mxu0 0
      %1229 = vmatpush1.bf16.xpose.msra.mxu0 0
      %1230 = vmatprep.subr.bf16.mxu0 0
      %1231 = vmatpush1.bf16.xpose.msra.mxu0 %v1214
      %1232 = vmatprep.subr.bf16.mxu0 0
      %1233 = vmatpush2.bf16.xpose.msra.mxu0 0
      %1234 = vmatprep.subr.bf16.mxu0 0
      %1235 = vmatpush2.bf16.xpose.msra.mxu0 0
      %1236 = vmatprep.subr.bf16.mxu0 0
      %1237 = vmatpush2.bf16.xpose.msra.mxu0 0
      %1238 = vmatprep.subr.bf16.mxu0 0
      %1239 = vmatpush2.bf16.xpose.msra.mxu0 0
      %1240 = vmatprep.subr.bf16.mxu0 0
      %1241 = vmatpush2.bf16.xpose.msra.mxu0 0
      %1242 = vmatprep.subr.bf16.mxu0 0
      %1243 = vmatpush2.bf16.xpose.msra.mxu0 0
      %1244 = vmatprep.subr.bf16.mxu0 0
      %1245 = vmatpush2.bf16.xpose.msra.mxu0 0
      %1246 = vmatprep.subr.bf16.mxu0 0
      %1247 = vmatpush2.bf16.xpose.msra.mxu0 0
      %1248 = vmatprep.mubr.bf16.mxu0 0
      %1249 = vmatmul.mubr.bf16.gmra.mxu0 %v1211
      %v1250 = vpop.f32.mrf.mxu0
      %v1251 = vadd.f32 0.0, %v1250
      %v1252 = vpop.f32.mrf.mxu0
      %v1253 = vpop.f32.mrf.mxu0
      %v1254 = vpop.f32.mrf.mxu0
      %1255 = vdwg.mxu0
      %v1257 = vsel %vm1209, %v1062, 0
      %v1260 = vsel %vm1209, %v1134, 0
      %1262 = vmatprep.subr.bf16.mxu0 0
      %1263 = vmatpush1.bf16.xpose.msra.mxu0 0
      %1264 = vmatprep.subr.bf16.mxu0 0
      %1265 = vmatpush1.bf16.xpose.msra.mxu0 0
      %1266 = vmatprep.subr.bf16.mxu0 0
      %1267 = vmatpush1.bf16.xpose.msra.mxu0 0
      %1268 = vmatprep.subr.bf16.mxu0 0
      %1269 = vmatpush1.bf16.xpose.msra.mxu0 0
      %1270 = vmatprep.subr.bf16.mxu0 0
      %1271 = vmatpush1.bf16.xpose.msra.mxu0 0
      %1272 = vmatprep.subr.bf16.mxu0 0
      %1273 = vmatpush1.bf16.xpose.msra.mxu0 0
      %1274 = vmatprep.subr.bf16.mxu0 0
      %1275 = vmatpush1.bf16.xpose.msra.mxu0 0
      %1276 = vmatprep.subr.bf16.mxu0 0
      %1277 = vmatpush1.bf16.xpose.msra.mxu0 %v1260
      %1278 = vmatprep.subr.bf16.mxu0 0
      %1279 = vmatpush2.bf16.xpose.msra.mxu0 0
      %1280 = vmatprep.subr.bf16.mxu0 0
      %1281 = vmatpush2.bf16.xpose.msra.mxu0 0
      %1282 = vmatprep.subr.bf16.mxu0 0
      %1283 = vmatpush2.bf16.xpose.msra.mxu0 0
      %1284 = vmatprep.subr.bf16.mxu0 0
      %1285 = vmatpush2.bf16.xpose.msra.mxu0 0
      %1286 = vmatprep.subr.bf16.mxu0 0
      %1287 = vmatpush2.bf16.xpose.msra.mxu0 0
      %1288 = vmatprep.subr.bf16.mxu0 0
      %1289 = vmatpush2.bf16.xpose.msra.mxu0 0
      %1290 = vmatprep.subr.bf16.mxu0 0
      %1291 = vmatpush2.bf16.xpose.msra.mxu0 0
      %1292 = vmatprep.subr.bf16.mxu0 0
      %1293 = vmatpush2.bf16.xpose.msra.mxu0 0
      %1294 = vmatprep.mubr.bf16.mxu0 0
      %1295 = vmatmul.mubr.bf16.gmra.mxu0 %v1257
      %v1296 = vpop.f32.mrf.mxu0
      %v1297 = vadd.f32 0.0, %v1296
      %v1298 = vpop.f32.mrf.mxu0
      %v1299 = vpop.f32.mrf.mxu0
      %v1300 = vpop.f32.mrf.mxu0
      %1301 = vdwg.mxu0
      %v1303 = vsel %vm1209, %v1063, 0
      %v1306 = vsel %vm1209, %v1135, 0
      %1308 = vmatprep.subr.bf16.mxu0 0
      %1309 = vmatpush1.bf16.xpose.msra.mxu0 0
      %1310 = vmatprep.subr.bf16.mxu0 0
      %1311 = vmatpush1.bf16.xpose.msra.mxu0 0
      %1312 = vmatprep.subr.bf16.mxu0 0
      %1313 = vmatpush1.bf16.xpose.msra.mxu0 0
      %1314 = vmatprep.subr.bf16.mxu0 0
      %1315 = vmatpush1.bf16.xpose.msra.mxu0 0
      %1316 = vmatprep.subr.bf16.mxu0 0
      %1317 = vmatpush1.bf16.xpose.msra.mxu0 0
      %1318 = vmatprep.subr.bf16.mxu0 0
      %1319 = vmatpush1.bf16.xpose.msra.mxu0 0
      %1320 = vmatprep.subr.bf16.mxu0 0
      %1321 = vmatpush1.bf16.xpose.msra.mxu0 0
      %1322 = vmatprep.subr.bf16.mxu0 0
      %1323 = vmatpush1.bf16.xpose.msra.mxu0 %v1306
      %1324 = vmatprep.subr.bf16.mxu0 0
      %1325 = vmatpush2.bf16.xpose.msra.mxu0 0
      %1326 = vmatprep.subr.bf16.mxu0 0
      %1327 = vmatpush2.bf16.xpose.msra.mxu0 0
      %1328 = vmatprep.subr.bf16.mxu0 0
      %1329 = vmatpush2.bf16.xpose.msra.mxu0 0
      %1330 = vmatprep.subr.bf16.mxu0 0
      %1331 = vmatpush2.bf16.xpose.msra.mxu0 0
      %1332 = vmatprep.subr.bf16.mxu0 0
      %1333 = vmatpush2.bf16.xpose.msra.mxu0 0
      %1334 = vmatprep.subr.bf16.mxu0 0
      %1335 = vmatpush2.bf16.xpose.msra.mxu0 0
      %1336 = vmatprep.subr.bf16.mxu0 0
      %1337 = vmatpush2.bf16.xpose.msra.mxu0 0
      %1338 = vmatprep.subr.bf16.mxu0 0
      %1339 = vmatpush2.bf16.xpose.msra.mxu0 0
      %1340 = vmatprep.mubr.bf16.mxu0 0
      %1341 = vmatmul.mubr.bf16.gmra.mxu0 %v1303
      %v1342 = vpop.f32.mrf.mxu0
      %v1343 = vadd.f32 0.0, %v1342
      %v1344 = vpop.f32.mrf.mxu0
      %v1345 = vpop.f32.mrf.mxu0
      %v1346 = vpop.f32.mrf.mxu0
      %1347 = vdwg.mxu0
      %v1349 = vsel %vm1209, %v1064, 0
      %v1352 = vsel %vm1209, %v1136, 0
      %1354 = vmatprep.subr.bf16.mxu0 0
      %1355 = vmatpush1.bf16.xpose.msra.mxu0 0
      %1356 = vmatprep.subr.bf16.mxu0 0
      %1357 = vmatpush1.bf16.xpose.msra.mxu0 0
      %1358 = vmatprep.subr.bf16.mxu0 0
      %1359 = vmatpush1.bf16.xpose.msra.mxu0 0
      %1360 = vmatprep.subr.bf16.mxu0 0
      %1361 = vmatpush1.bf16.xpose.msra.mxu0 0
      %1362 = vmatprep.subr.bf16.mxu0 0
      %1363 = vmatpush1.bf16.xpose.msra.mxu0 0
      %1364 = vmatprep.subr.bf16.mxu0 0
      %1365 = vmatpush1.bf16.xpose.msra.mxu0 0
      %1366 = vmatprep.subr.bf16.mxu0 0
      %1367 = vmatpush1.bf16.xpose.msra.mxu0 0
      %1368 = vmatprep.subr.bf16.mxu0 0
      %1369 = vmatpush1.bf16.xpose.msra.mxu0 %v1352
      %1370 = vmatprep.subr.bf16.mxu0 0
      %1371 = vmatpush2.bf16.xpose.msra.mxu0 0
      %1372 = vmatprep.subr.bf16.mxu0 0
      %1373 = vmatpush2.bf16.xpose.msra.mxu0 0
      %1374 = vmatprep.subr.bf16.mxu0 0
      %1375 = vmatpush2.bf16.xpose.msra.mxu0 0
      %1376 = vmatprep.subr.bf16.mxu0 0
      %1377 = vmatpush2.bf16.xpose.msra.mxu0 0
      %1378 = vmatprep.subr.bf16.mxu0 0
      %1379 = vmatpush2.bf16.xpose.msra.mxu0 0
      %1380 = vmatprep.subr.bf16.mxu0 0
      %1381 = vmatpush2.bf16.xpose.msra.mxu0 0
      %1382 = vmatprep.subr.bf16.mxu0 0
      %1383 = vmatpush2.bf16.xpose.msra.mxu0 0
      %1384 = vmatprep.subr.bf16.mxu0 0
      %1385 = vmatpush2.bf16.xpose.msra.mxu0 0
      %1386 = vmatprep.mubr.bf16.mxu0 0
      %1387 = vmatmul.mubr.bf16.gmra.mxu0 %v1349
      %v1388 = vpop.f32.mrf.mxu0
      %v1389 = vadd.f32 0.0, %v1388
      %v1390 = vpop.f32.mrf.mxu0
      %v1391 = vpop.f32.mrf.mxu0
      %v1392 = vpop.f32.mrf.mxu0
      %1393 = vdwg.mxu0
      %v1394 = vlaneseq
      %v1395 = vshrl.u32 %v1394, 7
      %v1396 = vlaneseq
      %v1397 = vand.u32 %v1396, 127
      %vm1398 = vcmp.le.s32.totalorder %v1397, %v1395
      %v1399 = vsel %vm1398, 1, 0
      %vm1400 = vcmp.eq.s32.totalorder %v1399, 1
      %v1401 = vsel %vm1400, %v1251, -1e+30
      %v1402 = vsel %vm1400, %v1297, -1e+30
      %v1403 = vsel %vm1400, %v1343, -1e+30
      %v1404 = vsel %vm1400, %v1389, -1e+30
      %v1405 = vsel %vm1209, %v1401, -inf
      %1406 = vmax.xlane.f32.xlu0 %v1405
      %v1407 = vpop.xlane.xlu0 %1406
      %v1408 = vsel %vm1209, %v1402, -inf
      %1409 = vmax.xlane.f32.xlu0 %v1408
      %v1410 = vpop.xlane.xlu0 %1409
      %v1411 = vsel %vm1209, %v1403, -inf
      %1412 = vmax.xlane.f32.xlu0 %v1411
      %v1413 = vpop.xlane.xlu0 %1412
      %v1414 = vsel %vm1209, %v1404, -inf
      %1415 = vmax.xlane.f32.xlu0 %v1414
      %v1416 = vpop.xlane.xlu0 %1415
      %v1417 = vsub.f32 %v1401, %v1407
      %v1418 = vsub.f32 %v1402, %v1410
      %v1419 = vsub.f32 %v1403, %v1413
      %v1420 = vsub.f32 %v1404, %v1416
      %v1421 = vmul.f32 %v1417, 1.442695
      %v1422 = vpow.pop %v1421
      %v1423 = vmul.f32 %v1418, 1.442695
      %v1424 = vpow.pop %v1423
      %v1425 = vmul.f32 %v1419, 1.442695
      %v1426 = vpow.pop %v1425
      %v1427 = vmul.f32 %v1420, 1.442695
      %v1428 = vpow.pop %v1427
      %v1429 = vsel %vm1209, %v1422, 0.0
      %1430 = vadd.xlane.f32.xlu0 %v1429
      %v1431 = vpop.xlane.xlu0 %1430
      %v1432 = vsel %vm1209, %v1424, 0.0
      %1433 = vadd.xlane.f32.xlu0 %v1432
      %v1434 = vpop.xlane.xlu0 %1433
      %v1435 = vsel %vm1209, %v1426, 0.0
      %1436 = vadd.xlane.f32.xlu0 %v1435
      %v1437 = vpop.xlane.xlu0 %1436
      %v1438 = vsel %vm1209, %v1428, 0.0
      %1439 = vadd.xlane.f32.xlu0 %v1438
      %v1440 = vpop.xlane.xlu0 %1439
      %v1441 = vrcp.pop %v1431
      %v1442 = vrcp.pop %v1434
      %v1443 = vrcp.pop %v1437
      %v1444 = vrcp.pop %v1440
      %v1445 = vmul.f32 %v1422, %v1441
      %v1446 = vmul.f32 %v1424, %v1442
      %v1447 = vmul.f32 %v1426, %v1443
      %v1448 = vmul.f32 %v1428, %v1444
      %v1449 = vpack.c.bf16 %v1445, %v1445
      %v1450 = vpack.c.bf16 %v1446, %v1446
      %v1451 = vpack.c.bf16 %v1447, %v1447
      %v1452 = vpack.c.bf16 %v1448, %v1448
      %v1454 = vsel %vm1209, %v1449, 0
      %vm1456 = vcmask 1043456
      %v1458 = vsel %vm1456, %v1205, 0
      %1460 = vmatprep.subr.bf16.mxu0 0
      %1461 = vmatpush1.bf16.msra.mxu0 0
      %1462 = vmatprep.subr.bf16.mxu0 0
      %1463 = vmatpush1.bf16.msra.mxu0 0
      %1464 = vmatprep.subr.bf16.mxu0 0
      %1465 = vmatpush1.bf16.msra.mxu0 0
      %1466 = vmatprep.subr.bf16.mxu0 0
      %1467 = vmatpush1.bf16.msra.mxu0 0
      %1468 = vmatprep.subr.bf16.mxu0 0
      %1469 = vmatpush1.bf16.msra.mxu0 0
      %1470 = vmatprep.subr.bf16.mxu0 0
      %1471 = vmatpush1.bf16.msra.mxu0 0
      %1472 = vmatprep.subr.bf16.mxu0 0
      %1473 = vmatpush1.bf16.msra.mxu0 0
      %1474 = vmatprep.subr.bf16.mxu0 0
      %1475 = vmatpush1.bf16.msra.mxu0 %v1458
      %1476 = vmatprep.subr.bf16.mxu0 0
      %1477 = vmatpush2.bf16.msra.mxu0 0
      %1478 = vmatprep.subr.bf16.mxu0 0
      %1479 = vmatpush2.bf16.msra.mxu0 0
      %1480 = vmatprep.subr.bf16.mxu0 0
      %1481 = vmatpush2.bf16.msra.mxu0 0
      %1482 = vmatprep.subr.bf16.mxu0 0
      %1483 = vmatpush2.bf16.msra.mxu0 0
      %1484 = vmatprep.subr.bf16.mxu0 0
      %1485 = vmatpush2.bf16.msra.mxu0 0
      %1486 = vmatprep.subr.bf16.mxu0 0
      %1487 = vmatpush2.bf16.msra.mxu0 0
      %1488 = vmatprep.subr.bf16.mxu0 0
      %1489 = vmatpush2.bf16.msra.mxu0 0
      %1490 = vmatprep.subr.bf16.mxu0 0
      %1491 = vmatpush2.bf16.msra.mxu0 0
      %1492 = vmatprep.mubr.bf16.mxu0 0
      %1493 = vmatmul.mubr.bf16.gmra.mxu0 %v1454
      %v1494 = vpop.f32.mrf.mxu0
      %v1495 = vadd.f32 0.0, %v1494
      %v1496 = vpop.f32.mrf.mxu0
      %v1497 = vpop.f32.mrf.mxu0
      %v1498 = vpop.f32.mrf.mxu0
      %1499 = vdwg.mxu0
      %v1501 = vsel %vm1209, %v1450, 0
      %v1504 = vsel %vm1456, %v1206, 0
      %1506 = vmatprep.subr.bf16.mxu0 0
      %1507 = vmatpush1.bf16.msra.mxu0 0
      %1508 = vmatprep.subr.bf16.mxu0 0
      %1509 = vmatpush1.bf16.msra.mxu0 0
      %1510 = vmatprep.subr.bf16.mxu0 0
      %1511 = vmatpush1.bf16.msra.mxu0 0
      %1512 = vmatprep.subr.bf16.mxu0 0
      %1513 = vmatpush1.bf16.msra.mxu0 0
      %1514 = vmatprep.subr.bf16.mxu0 0
      %1515 = vmatpush1.bf16.msra.mxu0 0
      %1516 = vmatprep.subr.bf16.mxu0 0
      %1517 = vmatpush1.bf16.msra.mxu0 0
      %1518 = vmatprep.subr.bf16.mxu0 0
      %1519 = vmatpush1.bf16.msra.mxu0 0
      %1520 = vmatprep.subr.bf16.mxu0 0
      %1521 = vmatpush1.bf16.msra.mxu0 %v1504
      %1522 = vmatprep.subr.bf16.mxu0 0
      %1523 = vmatpush2.bf16.msra.mxu0 0
      %1524 = vmatprep.subr.bf16.mxu0 0
      %1525 = vmatpush2.bf16.msra.mxu0 0
      %1526 = vmatprep.subr.bf16.mxu0 0
      %1527 = vmatpush2.bf16.msra.mxu0 0
      %1528 = vmatprep.subr.bf16.mxu0 0
      %1529 = vmatpush2.bf16.msra.mxu0 0
      %1530 = vmatprep.subr.bf16.mxu0 0
      %1531 = vmatpush2.bf16.msra.mxu0 0
      %1532 = vmatprep.subr.bf16.mxu0 0
      %1533 = vmatpush2.bf16.msra.mxu0 0
      %1534 = vmatprep.subr.bf16.mxu0 0
      %1535 = vmatpush2.bf16.msra.mxu0 0
      %1536 = vmatprep.subr.bf16.mxu0 0
      %1537 = vmatpush2.bf16.msra.mxu0 0
      %1538 = vmatprep.mubr.bf16.mxu0 0
      %1539 = vmatmul.mubr.bf16.gmra.mxu0 %v1501
      %v1540 = vpop.f32.mrf.mxu0
      %v1541 = vadd.f32 0.0, %v1540
      %v1542 = vpop.f32.mrf.mxu0
      %v1543 = vpop.f32.mrf.mxu0
      %v1544 = vpop.f32.mrf.mxu0
      %1545 = vdwg.mxu0
      %v1547 = vsel %vm1209, %v1451, 0
      %v1550 = vsel %vm1456, %v1207, 0
      %1552 = vmatprep.subr.bf16.mxu0 0
      %1553 = vmatpush1.bf16.msra.mxu0 0
      %1554 = vmatprep.subr.bf16.mxu0 0
      %1555 = vmatpush1.bf16.msra.mxu0 0
      %1556 = vmatprep.subr.bf16.mxu0 0
      %1557 = vmatpush1.bf16.msra.mxu0 0
      %1558 = vmatprep.subr.bf16.mxu0 0
      %1559 = vmatpush1.bf16.msra.mxu0 0
      %1560 = vmatprep.subr.bf16.mxu0 0
      %1561 = vmatpush1.bf16.msra.mxu0 0
      %1562 = vmatprep.subr.bf16.mxu0 0
      %1563 = vmatpush1.bf16.msra.mxu0 0
      %1564 = vmatprep.subr.bf16.mxu0 0
      %1565 = vmatpush1.bf16.msra.mxu0 0
      %1566 = vmatprep.subr.bf16.mxu0 0
      %1567 = vmatpush1.bf16.msra.mxu0 %v1550
      %1568 = vmatprep.subr.bf16.mxu0 0
      %1569 = vmatpush2.bf16.msra.mxu0 0
      %1570 = vmatprep.subr.bf16.mxu0 0
      %1571 = vmatpush2.bf16.msra.mxu0 0
      %1572 = vmatprep.subr.bf16.mxu0 0
      %1573 = vmatpush2.bf16.msra.mxu0 0
      %1574 = vmatprep.subr.bf16.mxu0 0
      %1575 = vmatpush2.bf16.msra.mxu0 0
      %1576 = vmatprep.subr.bf16.mxu0 0
      %1577 = vmatpush2.bf16.msra.mxu0 0
      %1578 = vmatprep.subr.bf16.mxu0 0
      %1579 = vmatpush2.bf16.msra.mxu0 0
      %1580 = vmatprep.subr.bf16.mxu0 0
      %1581 = vmatpush2.bf16.msra.mxu0 0
      %1582 = vmatprep.subr.bf16.mxu0 0
      %1583 = vmatpush2.bf16.msra.mxu0 0
      %1584 = vmatprep.mubr.bf16.mxu0 0
      %1585 = vmatmul.mubr.bf16.gmra.mxu0 %v1547
      %v1586 = vpop.f32.mrf.mxu0
      %v1587 = vadd.f32 0.0, %v1586
      %v1588 = vpop.f32.mrf.mxu0
      %v1589 = vpop.f32.mrf.mxu0
      %v1590 = vpop.f32.mrf.mxu0
      %1591 = vdwg.mxu0
      %v1593 = vsel %vm1209, %v1452, 0
      %v1596 = vsel %vm1456, %v1208, 0
      %1598 = vmatprep.subr.bf16.mxu0 0
      %1599 = vmatpush1.bf16.msra.mxu0 0
      %1600 = vmatprep.subr.bf16.mxu0 0
      %1601 = vmatpush1.bf16.msra.mxu0 0
      %1602 = vmatprep.subr.bf16.mxu0 0
      %1603 = vmatpush1.bf16.msra.mxu0 0
      %1604 = vmatprep.subr.bf16.mxu0 0
      %1605 = vmatpush1.bf16.msra.mxu0 0
      %1606 = vmatprep.subr.bf16.mxu0 0
      %1607 = vmatpush1.bf16.msra.mxu0 0
      %1608 = vmatprep.subr.bf16.mxu0 0
      %1609 = vmatpush1.bf16.msra.mxu0 0
      %1610 = vmatprep.subr.bf16.mxu0 0
      %1611 = vmatpush1.bf16.msra.mxu0 0
      %1612 = vmatprep.subr.bf16.mxu0 0
      %1613 = vmatpush1.bf16.msra.mxu0 %v1596
      %1614 = vmatprep.subr.bf16.mxu0 0
      %1615 = vmatpush2.bf16.msra.mxu0 0
      %1616 = vmatprep.subr.bf16.mxu0 0
      %1617 = vmatpush2.bf16.msra.mxu0 0
      %1618 = vmatprep.subr.bf16.mxu0 0
      %1619 = vmatpush2.bf16.msra.mxu0 0
      %1620 = vmatprep.subr.bf16.mxu0 0
      %1621 = vmatpush2.bf16.msra.mxu0 0
      %1622 = vmatprep.subr.bf16.mxu0 0
      %1623 = vmatpush2.bf16.msra.mxu0 0
      %1624 = vmatprep.subr.bf16.mxu0 0
      %1625 = vmatpush2.bf16.msra.mxu0 0
      %1626 = vmatprep.subr.bf16.mxu0 0
      %1627 = vmatpush2.bf16.msra.mxu0 0
      %1628 = vmatprep.subr.bf16.mxu0 0
      %1629 = vmatpush2.bf16.msra.mxu0 0
      %1630 = vmatprep.mubr.bf16.mxu0 0
      %1631 = vmatmul.mubr.bf16.gmra.mxu0 %v1593
      %v1632 = vpop.f32.mrf.mxu0
      %v1633 = vadd.f32 0.0, %v1632
      %v1634 = vpop.f32.mrf.mxu0
      %v1635 = vpop.f32.mrf.mxu0
      %v1636 = vpop.f32.mrf.mxu0
      %1637 = vdwg.mxu0
      %v1638 = vcombine.low %v1495, %v1587
      %v1639 = vcombine.high %v1495, %v1587
      %v1641 = vunpack.c.l.s4 1983009808
      %v1642 = vunpack.c.0.s8 %v1641
      %v1643 = vlaneseq
      %v1644 = vshrl.u32 %v1643, 7
      %v1645 = vsub.s32 %v1642, %v1644
      %v1646 = vrot.slane %v1638, %v1645
      %v1648 = vunpack.c.l.s4 1983009808
      %v1649 = vunpack.c.0.s8 %v1648
      %v1650 = vlaneseq
      %v1651 = vshrl.u32 %v1650, 7
      %v1652 = vsub.s32 %v1649, %v1651
      %v1653 = vrot.slane %v1639, %v1652
      %v1654 = vcombine.low %v1541, %v1633
      %v1655 = vcombine.high %v1541, %v1633
      %v1657 = vunpack.c.l.s4 1983009808
      %v1658 = vunpack.c.0.s8 %v1657
      %v1659 = vlaneseq
      %v1660 = vshrl.u32 %v1659, 7
      %v1661 = vsub.s32 %v1658, %v1660
      %v1662 = vrot.slane %v1654, %v1661
      %v1664 = vunpack.c.l.s4 1983009808
      %v1665 = vunpack.c.0.s8 %v1664
      %v1666 = vlaneseq
      %v1667 = vshrl.u32 %v1666, 7
      %v1668 = vsub.s32 %v1665, %v1667
      %v1669 = vrot.slane %v1655, %v1668
      %v1670 = vcombine.low %v1646, %v1662
      %v1671 = vcombine.high %v1646, %v1662
      %v1673 = vunpack.c.l.s4 1934713408
      %v1674 = vunpack.c.0.s8 %v1673
      %v1675 = vlaneseq
      %v1676 = vshrl.u32 %v1675, 7
      %v1677 = vsub.s32 %v1674, %v1676
      %v1678 = vrot.slane %v1670, %v1677
      %v1680 = vunpack.c.l.s4 1934713408
      %v1681 = vunpack.c.0.s8 %v1680
      %v1682 = vlaneseq
      %v1683 = vshrl.u32 %v1682, 7
      %v1684 = vsub.s32 %v1681, %v1683
      %v1685 = vrot.slane %v1671, %v1684
      %v1686 = vcombine.low %v1653, %v1669
      %v1687 = vcombine.high %v1653, %v1669
      %v1689 = vunpack.c.l.s4 1934713408
      %v1690 = vunpack.c.0.s8 %v1689
      %v1691 = vlaneseq
      %v1692 = vshrl.u32 %v1691, 7
      %v1693 = vsub.s32 %v1690, %v1692
      %v1694 = vrot.slane %v1686, %v1693
      %v1696 = vunpack.c.l.s4 1934713408
      %v1697 = vunpack.c.0.s8 %v1696
      %v1698 = vlaneseq
      %v1699 = vshrl.u32 %v1698, 7
      %v1700 = vsub.s32 %v1697, %v1699
      %v1701 = vrot.slane %v1687, %v1700
      %v1702 = vcombine.high %v1678, 0.0
      %v1703 = vcombine.high %v1685, 0.0
      %v1704 = vcombine.high %v1694, 0.0
      %v1705 = vcombine.high %v1701, 0.0
      %v1706 = vcombine.low %v1678, %v1685
      %v1708 = vunpack.c.l.s4 1983009808
      %v1709 = vunpack.c.0.s8 %v1708
      %v1710 = vlaneseq
      %v1711 = vshrl.u32 %v1710, 7
      %v1712 = vsub.s32 %v1709, %v1711
      %v1713 = vrot.slane %v1706, %v1712
      %v1714 = vcombine.low %v1702, %v1703
      %v1716 = vunpack.c.l.s4 1983009808
      %v1717 = vunpack.c.0.s8 %v1716
      %v1718 = vlaneseq
      %v1719 = vshrl.u32 %v1718, 7
      %v1720 = vsub.s32 %v1717, %v1719
      %v1721 = vrot.slane %v1714, %v1720
      %v1722 = vcombine.low %v1694, %v1701
      %v1724 = vunpack.c.l.s4 1983009808
      %v1725 = vunpack.c.0.s8 %v1724
      %v1726 = vlaneseq
      %v1727 = vshrl.u32 %v1726, 7
      %v1728 = vsub.s32 %v1725, %v1727
      %v1729 = vrot.slane %v1722, %v1728
      %v1730 = vcombine.low %v1704, %v1705
      %v1732 = vunpack.c.l.s4 1983009808
      %v1733 = vunpack.c.0.s8 %v1732
      %v1734 = vlaneseq
      %v1735 = vshrl.u32 %v1734, 7
      %v1736 = vsub.s32 %v1733, %v1735
      %v1737 = vrot.slane %v1730, %v1736
      %v1738 = vcombine.low %v1713, %v1721
      %v1739 = vcombine.high %v1713, %v1721
      %v1741 = vunpack.c.l.s4 1934713408
      %v1742 = vunpack.c.0.s8 %v1741
      %v1743 = vlaneseq
      %v1744 = vshrl.u32 %v1743, 7
      %v1745 = vsub.s32 %v1742, %v1744
      %v1746 = vrot.slane %v1738, %v1745
      %v1748 = vunpack.c.l.s4 1934713408
      %v1749 = vunpack.c.0.s8 %v1748
      %v1750 = vlaneseq
      %v1751 = vshrl.u32 %v1750, 7
      %v1752 = vsub.s32 %v1749, %v1751
      %v1753 = vrot.slane %v1739, %v1752
      %v1754 = vcombine.low %v1729, %v1737
      %v1755 = vcombine.high %v1729, %v1737
      %v1757 = vunpack.c.l.s4 1934713408
      %v1758 = vunpack.c.0.s8 %v1757
      %v1759 = vlaneseq
      %v1760 = vshrl.u32 %v1759, 7
      %v1761 = vsub.s32 %v1758, %v1760
      %v1762 = vrot.slane %v1754, %v1761
      %v1764 = vunpack.c.l.s4 1934713408
      %v1765 = vunpack.c.0.s8 %v1764
      %v1766 = vlaneseq
      %v1767 = vshrl.u32 %v1766, 7
      %v1768 = vsub.s32 %v1765, %v1767
      %v1769 = vrot.slane %v1755, %v1768
      %v1770 = vcombine.low %v1746, %v1762
      %v1771 = vcombine.high %v1746, %v1762
      %v1772 = vcombine.low %v1753, %v1769
      %v1773 = vcombine.high %v1753, %v1769
      %1775 = vrot.lane.b32.xlu0 %v1771, 8
      %v1776 = vpop.permute.xlu0 %1775
      %1779 = vrot.lane.b32.xlu0 %v1772, 16
      %v1780 = vpop.permute.xlu0 %1779
      %1783 = vrot.lane.b32.xlu0 %v1773, 24
      %v1784 = vpop.permute.xlu0 %1783
      %v1786 = vsel %vm1209, %v1770, %v1776
      %vm1787 = vcmask 130048
      %v1788 = vsel %vm1787, %v1786, %v1780
      %vm1789 = vcmask 195584
      %v1790 = vsel %vm1789, %v1788, %v1784
      %v1791 = vpack.c.bf16 %v1790, %v1790
      %v1792 = vld [vmem:[%s610] sm:$0xf]
      %v1793 = vld [vmem:[%s610 + $0x4] sm:$0xf]
      %v1794 = vld [vmem:[%s610 + $0x8] sm:$0xf]
      %v1795 = vld [vmem:[%s610 + $0xc] sm:$0xf]
      %v1796 = vld [vmem:[%s613] sm:$0x1]
      %v1798 = vlaneseq
      %v1799 = vshrl.u32 %v1798, 7
      %v1800 = vsub.s32 0, %v1799
      %v1801 = vrot.slane %v1796, %v1800
      %v1807 = vunpack.c.l.b16 %v1792
      %v1808 = vunpack.c.l.b16 %v1793
      %v1809 = vunpack.c.l.b16 %v1794
      %v1810 = vunpack.c.l.b16 %v1795
      %v1811 = vpack.c.b16 %v1808, %v1807
      %v1812 = vpack.c.b16 %v1810, %v1809
      %v1816 = vsel %vm651, %v1791, 0
      %1818 = vmatprep.subr.bf16.mxu0 0
      %1819 = vmatpush1.bf16.msra.mxu0 0
      %1820 = vmatprep.subr.bf16.mxu0 0
      %1821 = vmatpush1.bf16.msra.mxu0 0
      %1822 = vmatprep.subr.bf16.mxu0 0
      %1823 = vmatpush1.bf16.msra.mxu0 0
      %1824 = vmatprep.subr.bf16.mxu0 0
      %1825 = vmatpush1.bf16.msra.mxu0 0
      %1826 = vmatprep.subr.bf16.mxu0 0
      %1827 = vmatpush1.bf16.msra.mxu0 0
      %1828 = vmatprep.subr.bf16.mxu0 0
      %1829 = vmatpush1.bf16.msra.mxu0 0
      %1830 = vmatprep.subr.bf16.mxu0 0
      %1831 = vmatpush1.bf16.msra.mxu0 %v1812
      %1832 = vmatprep.subr.bf16.mxu0 0
      %1833 = vmatpush1.bf16.msra.mxu0 %v1811
      %1834 = vmatprep.subr.bf16.mxu0 0
      %1835 = vmatpush2.bf16.msra.mxu0 0
      %1836 = vmatprep.subr.bf16.mxu0 0
      %1837 = vmatpush2.bf16.msra.mxu0 0
      %1838 = vmatprep.subr.bf16.mxu0 0
      %1839 = vmatpush2.bf16.msra.mxu0 0
      %1840 = vmatprep.subr.bf16.mxu0 0
      %1841 = vmatpush2.bf16.msra.mxu0 0
      %1842 = vmatprep.subr.bf16.mxu0 0
      %1843 = vmatpush2.bf16.msra.mxu0 0
      %1844 = vmatprep.subr.bf16.mxu0 0
      %1845 = vmatpush2.bf16.msra.mxu0 0
      %1846 = vmatprep.subr.bf16.mxu0 0
      %1847 = vmatpush2.bf16.msra.mxu0 0
      %1848 = vmatprep.subr.bf16.mxu0 0
      %1849 = vmatpush2.bf16.msra.mxu0 0
      %1850 = vmatprep.mubr.bf16.mxu0 0
      %1851 = vmatmul.mubr.bf16.gmra.mxu0 %v1816
      %v1852 = vpop.f32.mrf.mxu0
      %v1853 = vadd.f32 %v1801, %v1852
      %v1854 = vpop.f32.mrf.mxu0
      %v1855 = vpop.f32.mrf.mxu0
      %v1856 = vpop.f32.mrf.mxu0
      %1857 = vdwg.mxu0
      %v1858 = vadd.f32 %v648, %v1853
      %v1859 = vld [vmem:[%s616] sm:$0x1]
      %v1860 = vld [vmem:[%s619] sm:$0x1]
      %v1861 = vsel %vm651, %v1858, 0.0
      %1862 = vadd.xlane.f32.xlu0 %v1861
      %v1863 = vpop.xlane.xlu0 %1862
      %v1864 = vmul.f32 %v1863, %v655
      %v1865 = vsub.f32 %v1858, %v1864
      %v1866 = vmul.f32 %v1865, %v1865
      %v1867 = vsel %vm651, %v1866, 0.0
      %1868 = vadd.xlane.f32.xlu0 %v1867
      %v1869 = vpop.xlane.xlu0 %1868
      %v1870 = vmul.f32 %v1869, %v655
      %v1871 = vadd.f32 %v1870, 1e-05
      %v1872 = vrsqrt.pop %v1871
      %v1873 = vmul.f32 %v1865, %v1872
      %v1875 = vlaneseq
      %v1876 = vshrl.u32 %v1875, 7
      %v1877 = vsub.s32 0, %v1876
      %v1878 = vrot.slane %v1859, %v1877
      %v1880 = vmul.f32 %v1873, %v1878
      %v1882 = vlaneseq
      %v1883 = vshrl.u32 %v1882, 7
      %v1884 = vsub.s32 0, %v1883
      %v1885 = vrot.slane %v1860, %v1884
      %v1887 = vadd.f32 %v1880, %v1885
      %v1888 = vpack.c.bf16 %v1887, %v1887
      %v1889 = vld [vmem:[%s624] sm:$0xf]
      %v1890 = vld [vmem:[%s624 + $0x4] sm:$0xf]
      %v1891 = vld [vmem:[%s624 + $0x8] sm:$0xf]
      %v1892 = vld [vmem:[%s624 + $0xc] sm:$0xf]
      %v1893 = vld [vmem:[%s627] sm:$0x1]
      %v1895 = vlaneseq
      %v1896 = vshrl.u32 %v1895, 7
      %v1897 = vsub.s32 0, %v1896
      %v1898 = vrot.slane %v1893, %v1897
      %v1904 = vunpack.c.l.b16 %v1889
      %v1905 = vunpack.c.l.b16 %v1890
      %v1906 = vunpack.c.l.b16 %v1891
      %v1907 = vunpack.c.l.b16 %v1892
      %v1908 = vpack.c.b16 %v1905, %v1904
      %v1909 = vpack.c.b16 %v1907, %v1906
      %v1913 = vsel %vm651, %v1888, 0
      %1915 = vmatprep.subr.bf16.mxu0 0
      %1916 = vmatpush1.bf16.msra.mxu0 0
      %1917 = vmatprep.subr.bf16.mxu0 0
      %1918 = vmatpush1.bf16.msra.mxu0 0
      %1919 = vmatprep.subr.bf16.mxu0 0
      %1920 = vmatpush1.bf16.msra.mxu0 0
      %1921 = vmatprep.subr.bf16.mxu0 0
      %1922 = vmatpush1.bf16.msra.mxu0 0
      %1923 = vmatprep.subr.bf16.mxu0 0
      %1924 = vmatpush1.bf16.msra.mxu0 0
      %1925 = vmatprep.subr.bf16.mxu0 0
      %1926 = vmatpush1.bf16.msra.mxu0 0
      %1927 = vmatprep.subr.bf16.mxu0 0
      %1928 = vmatpush1.bf16.msra.mxu0 %v1909
      %1929 = vmatprep.subr.bf16.mxu0 0
      %1930 = vmatpush1.bf16.msra.mxu0 %v1908
      %1931 = vmatprep.subr.bf16.mxu0 0
      %1932 = vmatpush2.bf16.msra.mxu0 0
      %1933 = vmatprep.subr.bf16.mxu0 0
      %1934 = vmatpush2.bf16.msra.mxu0 0
      %1935 = vmatprep.subr.bf16.mxu0 0
      %1936 = vmatpush2.bf16.msra.mxu0 0
      %1937 = vmatprep.subr.bf16.mxu0 0
      %1938 = vmatpush2.bf16.msra.mxu0 0
      %1939 = vmatprep.subr.bf16.mxu0 0
      %1940 = vmatpush2.bf16.msra.mxu0 0
      %1941 = vmatprep.subr.bf16.mxu0 0
      %1942 = vmatpush2.bf16.msra.mxu0 0
      %1943 = vmatprep.subr.bf16.mxu0 0
      %1944 = vmatpush2.bf16.msra.mxu0 0
      %1945 = vmatprep.subr.bf16.mxu0 0
      %1946 = vmatpush2.bf16.msra.mxu0 0
      %1947 = vmatprep.mubr.bf16.mxu0 0
      %1948 = vmatmul.mubr.bf16.gmra.mxu0 %v1913
      %v1949 = vpop.f32.mrf.mxu0
      %v1950 = vadd.f32 %v1898, %v1949
      %v1951 = vpop.f32.mrf.mxu0
      %v1952 = vpop.f32.mrf.mxu0
      %v1953 = vpop.f32.mrf.mxu0
      %1954 = vdwg.mxu0
      %v1955 = vmul.f32 %v1950, 0.5
      %v1956 = vmul.f32 %v1950, 0.044715
      %v1957 = vmul.f32 %v1956, %v1950
      %v1958 = vmul.f32 %v1957, %v1950
      %v1959 = vadd.f32 %v1950, %v1958
      %v1960 = vmul.f32 %v1959, 0.7978845
      %v1961 = vtanh.pop %v1960
      %v1962 = vadd.f32 %v1961, 1.0
      %v1963 = vmul.f32 %v1955, %v1962
      %v1964 = vpack.c.bf16 %v1963, %v1963
      %v1965 = vld [vmem:[%s632] sm:$0xf]
      %v1966 = vld [vmem:[%s632 + $0x4] sm:$0xf]
      %v1967 = vld [vmem:[%s632 + $0x8] sm:$0xf]
      %v1968 = vld [vmem:[%s632 + $0xc] sm:$0xf]
      %v1969 = vld [vmem:[%s632 + $0x10] sm:$0xf]
      %v1970 = vld [vmem:[%s632 + $0x14] sm:$0xf]
      %v1971 = vld [vmem:[%s632 + $0x18] sm:$0xf]
      %v1972 = vld [vmem:[%s632 + $0x1c] sm:$0xf]
      %v1973 = vld [vmem:[%s632 + $0x20] sm:$0xf]
      %v1974 = vld [vmem:[%s632 + $0x24] sm:$0xf]
      %v1975 = vld [vmem:[%s632 + $0x28] sm:$0xf]
      %v1976 = vld [vmem:[%s632 + $0x2c] sm:$0xf]
      %v1977 = vld [vmem:[%s632 + $0x30] sm:$0xf]
      %v1978 = vld [vmem:[%s632 + $0x34] sm:$0xf]
      %v1979 = vld [vmem:[%s632 + $0x38] sm:$0xf]
      %v1980 = vld [vmem:[%s632 + $0x3c] sm:$0xf]
      %v1981 = vld [vmem:[%s635] sm:$0x1]
      %v1983 = vlaneseq
      %v1984 = vshrl.u32 %v1983, 7
      %v1985 = vsub.s32 0, %v1984
      %v1986 = vrot.slane %v1981, %v1985
      %v2004 = vunpack.c.l.b16 %v1965
      %v2005 = vunpack.c.l.b16 %v1966
      %v2006 = vunpack.c.l.b16 %v1967
      %v2007 = vunpack.c.l.b16 %v1968
      %v2008 = vunpack.c.l.b16 %v1969
      %v2009 = vunpack.c.l.b16 %v1970
      %v2010 = vunpack.c.l.b16 %v1971
      %v2011 = vunpack.c.l.b16 %v1972
      %v2012 = vunpack.c.l.b16 %v1973
      %v2013 = vunpack.c.l.b16 %v1974
      %v2014 = vunpack.c.l.b16 %v1975
      %v2015 = vunpack.c.l.b16 %v1976
      %v2016 = vunpack.c.l.b16 %v1977
      %v2017 = vunpack.c.l.b16 %v1978
      %v2018 = vunpack.c.l.b16 %v1979
      %v2019 = vunpack.c.l.b16 %v1980
      %v2020 = vpack.c.b16 %v2005, %v2004
      %v2021 = vpack.c.b16 %v2007, %v2006
      %v2022 = vpack.c.b16 %v2009, %v2008
      %v2023 = vpack.c.b16 %v2011, %v2010
      %v2024 = vpack.c.b16 %v2013, %v2012
      %v2025 = vpack.c.b16 %v2015, %v2014
      %v2026 = vpack.c.b16 %v2017, %v2016
      %v2027 = vpack.c.b16 %v2019, %v2018
      %2036 = vmatprep.subr.bf16.mxu0 0
      %2037 = vmatpush1.bf16.msra.mxu0 %v2027
      %2038 = vmatprep.subr.bf16.mxu0 0
      %2039 = vmatpush1.bf16.msra.mxu0 %v2026
      %2040 = vmatprep.subr.bf16.mxu0 0
      %2041 = vmatpush1.bf16.msra.mxu0 %v2025
      %2042 = vmatprep.subr.bf16.mxu0 0
      %2043 = vmatpush1.bf16.msra.mxu0 %v2024
      %2044 = vmatprep.subr.bf16.mxu0 0
      %2045 = vmatpush1.bf16.msra.mxu0 %v2023
      %2046 = vmatprep.subr.bf16.mxu0 0
      %2047 = vmatpush1.bf16.msra.mxu0 %v2022
      %2048 = vmatprep.subr.bf16.mxu0 0
      %2049 = vmatpush1.bf16.msra.mxu0 %v2021
      %2050 = vmatprep.subr.bf16.mxu0 0
      %2051 = vmatpush1.bf16.msra.mxu0 %v2020
      %2052 = vmatprep.subr.bf16.mxu0 0
      %2053 = vmatpush2.bf16.msra.mxu0 0
      %2054 = vmatprep.subr.bf16.mxu0 0
      %2055 = vmatpush2.bf16.msra.mxu0 0
      %2056 = vmatprep.subr.bf16.mxu0 0
      %2057 = vmatpush2.bf16.msra.mxu0 0
      %2058 = vmatprep.subr.bf16.mxu0 0
      %2059 = vmatpush2.bf16.msra.mxu0 0
      %2060 = vmatprep.subr.bf16.mxu0 0
      %2061 = vmatpush2.bf16.msra.mxu0 0
      %2062 = vmatprep.subr.bf16.mxu0 0
      %2063 = vmatpush2.bf16.msra.mxu0 0
      %2064 = vmatprep.subr.bf16.mxu0 0
      %2065 = vmatpush2.bf16.msra.mxu0 0
      %2066 = vmatprep.subr.bf16.mxu0 0
      %2067 = vmatpush2.bf16.msra.mxu0 0
      %2068 = vmatprep.mubr.bf16.mxu0 0
      %2069 = vmatmul.mubr.bf16.gmra.mxu0 %v1964
      %v2070 = vpop.f32.mrf.mxu0
      %v2071 = vadd.f32 %v1986, %v2070
      %v2072 = vpop.f32.mrf.mxu0
      %v2073 = vpop.f32.mrf.mxu0
      %v2074 = vpop.f32.mrf.mxu0
      %2075 = vdwg.mxu0
      %v2076 = vadd.f32 %v1858, %v2071
      %2077 = vst.msk [vmem:[%s639] sm:$0xff] %vm651, %v2076
      %p2078 = scmp.lt.s32.totalorder %s28, 1
      %s2079 = scalar_select %p2078, %s28, 1
      %s2080 = smul.addr %s2079, 8
      %s2081 = scalar_lea.vmem %s13, %s2080
      // Predicated region
      $region77: #{my_gpt2_forward.2} parent=71 // pred_check
        %p2082 = pneg %p392
      $region78: #{my_gpt2_forward.2} parent=71 // pred_check_branch
        %2084 = sbr.rel (%p2082) target = $region80
      $region79: #{my_gpt2_forward.2} parent=71 // pred_region
        _
      $region80: #{my_gpt2_forward.2} parent=71 // pred_fallthru
        _
    $region72: #{my_gpt2_forward.2} parent=5 // pred_fallthru
      _
    %p2085 = scmp.le.s32.totalorder 2, %s19
    // Predicated region
    $region81: #{my_gpt2_forward.2} parent=5 // pred_check
      %p2086 = pneg %p2085
    $region82: #{my_gpt2_forward.2} parent=5 // pred_check_branch
      %2088 = sbr.rel (%p2086) target = $region84
    $region83: #{my_gpt2_forward.2} parent=5 // pred_region
      %s2089 = ssub.s32 %s19, 2
      // Predicated region
      $region85: #{my_gpt2_forward.2} parent=83 // pred_check
        %p2090 = pneg %p398
      $region86: #{my_gpt2_forward.2} parent=83 // pred_check_branch
        %2092 = sbr.rel (%p2090) target = $region88
      $region87: #{my_gpt2_forward.2} parent=83 // pred_region
        %p2093 = scmp.lt.s32.totalorder %s30, 1
        %s2094 = scalar_select %p2093, %s30, 1
        %s2095 = smul.addr %s2094, 8
        %s2096 = scalar_lea.vmem %s13, %s2095
      $region88: #{my_gpt2_forward.2} parent=83 // pred_fallthru
        _
    $region84: #{my_gpt2_forward.2} parent=5 // pred_fallthru
      _
  $region6: #{my_gpt2_forward.2} parent=0 // loop_footer
    %s23 = sadd.s32 1, %s19
  $region7: #{my_gpt2_forward.2} parent=0 // loop_footer_branch
    %18 = sbr.rel target = $region3
  $region8: #{my_gpt2_forward.2} parent=0 // loop_exit
    _

</llo_original>
